<compile_context>
chip_gen: v7x
topology: tpu7x:2x2x1
jax: 0.10.0
libtpu: 0.0.40
codegen_flags: <defaults>
</compile_context>

<pallas_src>
import functools
import math

import jax
import jax.numpy as jnp
from jax.experimental import pallas as pl
from jax.experimental.pallas import tpu as pltpu


def _mha_kernel(q_ref, k_ref, v_ref, wqkv_ref, woutT_ref, bout_ref, o_ref,
                *, n_head, bblk, sq, sk):
    E = o_ref.shape[-1]
    dh = E // n_head

    xq = q_ref[...]          # (bblk*sq, E) bf16
    xk = k_ref[...]          # (bblk*sk, E) bf16
    xv = v_ref[...]          # (bblk*sk, E) bf16

    # Q/K/V projections: one lane-dense (M, E) @ (E, E) MXU matmul each.
    # Batch+seq are folded into M, all heads into N via block-diagonal weights;
    # the 1/sqrt(dh) scale is already folded into the Q weights.
    qp = jnp.dot(xq, wqkv_ref[0], preferred_element_type=jnp.float32)  # (M, E) f32
    kp = jnp.dot(xk, wqkv_ref[1], preferred_element_type=jnp.float32)
    vp = jnp.dot(xv, wqkv_ref[2], preferred_element_type=jnp.float32)

    # Per-head scaled-dot-product attention (head split is logical, in-kernel).
    head_out = []
    for h in range(n_head):                       # static unrolled loop, H small
        sl = slice(h * dh, (h + 1) * dh)
        qh = qp[:, sl].reshape(bblk, sq, dh).astype(jnp.bfloat16)
        kh = kp[:, sl].reshape(bblk, sk, dh).astype(jnp.bfloat16)
        vh = vp[:, sl].reshape(bblk, sk, dh).astype(jnp.bfloat16)

        logits = jnp.einsum('bqd,bkd->bqk', qh, kh,
                            preferred_element_type=jnp.float32)   # (bblk, sq, sk)
        # TODO(synk): optional decoder mask would be applied to `logits` here.
        m = jnp.max(logits, axis=-1, keepdims=True)
        p = jnp.exp(logits - m)                                   # f32 softmax
        attn = p * pl.reciprocal(jnp.sum(p, axis=-1, keepdims=True), approx=True)

        sc = jnp.einsum('bqk,bkd->bqd', attn.astype(jnp.bfloat16), vh,
                        preferred_element_type=jnp.float32)       # (bblk, sq, dh)
        head_out.append(sc.reshape(bblk * sq, dh))

    concat = jnp.concatenate(head_out, axis=-1)                   # (M, E) f32

    # Fused head-concat + output Linear: single (M, E) @ (E, E) matmul + bias.
    out = jnp.dot(concat.astype(jnp.bfloat16), woutT_ref[...],
                  preferred_element_type=jnp.float32) + bout_ref[...]
    o_ref[...] = out.astype(o_ref.dtype)


def multi_head_attention(key, query, value, params, n_head, *, batch_block=None):
    """key/query/value: (B, S, E) float32. Returns (B, Sq, E) float32."""
    B, Sk, E = key.shape
    Sq = query.shape[1]
    dh = E // n_head
    assert n_head * dh == E

    if batch_block is None:
        batch_block = B          # collapse the grid: one step, all VMEM-resident
    assert B % batch_block == 0
    nb = B // batch_block
    # (8,128) rule: per-step row blocks must be sublane aligned unless full.
    assert nb == 1 or ((batch_block * Sq) % 8 == 0 and (batch_block * Sk) % 8 == 0)

    # Glue: lane-dense 2-D slabs (batch*seq, E); E stays on the lane axis.
    q2 = query.reshape(B * Sq, E).astype(jnp.bfloat16)
    k2 = key.reshape(B * Sk, E).astype(jnp.bfloat16)
    v2 = value.reshape(B * Sk, E).astype(jnp.bfloat16)

    # Per-head nn.Linear(dh, dh, bias=False) == block-diagonal (E, E) matmul on
    # the concatenated-head layout; fold 1/sqrt(dh) into the Q weights.
    eye = jnp.eye(n_head, dtype=jnp.float32)
    wq_full = jnp.kron(eye, params['w_q'].T) * (1.0 / math.sqrt(dh))
    wk_full = jnp.kron(eye, params['w_k'].T)
    wv_full = jnp.kron(eye, params['w_v'].T)
    wqkv = jnp.stack([wq_full, wk_full, wv_full]).astype(jnp.bfloat16)  # (3, E, E)
    woutT = params['w_out'].T.astype(jnp.bfloat16)                      # (E, E)
    bout = params['b_out'].reshape(1, E).astype(jnp.float32)

    kernel = functools.partial(_mha_kernel, n_head=n_head,
                               bblk=batch_block, sq=Sq, sk=Sk)

    out2 = pl.pallas_call(
        kernel,
        out_shape=jax.ShapeDtypeStruct((B * Sq, E), jnp.float32),
        grid=(nb,),
        in_specs=[
            pl.BlockSpec((batch_block * Sq, E), lambda i: (i, 0)),
            pl.BlockSpec((batch_block * Sk, E), lambda i: (i, 0)),
            pl.BlockSpec((batch_block * Sk, E), lambda i: (i, 0)),
            pl.BlockSpec((3, E, E), lambda i: (0, 0, 0)),   # stacked QKV weights
            pl.BlockSpec((E, E), lambda i: (0, 0)),
            pl.BlockSpec((1, E), lambda i: (0, 0)),
        ],
        out_specs=pl.BlockSpec((batch_block * Sq, E), lambda i: (i, 0)),
        compiler_params=pltpu.CompilerParams(
            dimension_semantics=("parallel",)),
    )(q2, k2, v2, wqkv, woutT, bout)

    return out2.reshape(B, Sq, E).astype(query.dtype)


def _reference(key, query, value, params, n_head):
    """Pure-JAX f32 transcription of the PyTorch forward (mask=None)."""
    B, Sk, E = key.shape
    Sq = query.shape[1]
    dh = E // n_head
    k = key.reshape(B, Sk, n_head, dh)
    q = query.reshape(B, Sq, n_head, dh)
    v = value.reshape(B, Sk, n_head, dh)
    Q = jnp.einsum('bshi,oi->bsho', q, params['w_q'])
    K = jnp.einsum('bshi,oi->bsho', k, params['w_k'])
    V = jnp.einsum('bshi,oi->bsho', v, params['w_v'])
    Q = jnp.transpose(Q, (0, 2, 1, 3))
    K = jnp.transpose(K, (0, 2, 1, 3))
    V = jnp.transpose(V, (0, 2, 1, 3))
    logits = jnp.einsum('bhqd,bhkd->bhqk', Q, K) / math.sqrt(dh)
    attn = jax.nn.softmax(logits, axis=-1)
    sc = jnp.einsum('bhqk,bhkd->bhqd', attn, V)
    concat = jnp.transpose(sc, (0, 2, 1, 3)).reshape(B, Sq, E)
    return concat @ params['w_out'].T + params['b_out']


if __name__ == "__main__":
    embed_dim, n_head = 32, 4
    d_head = embed_dim // n_head
    batch, seq = 2, 8

    # Deterministic inputs.
    kx = jax.random.PRNGKey(0)
    kk, kq, kv = jax.random.split(kx, 3)
    key_in = jax.random.normal(kk, (batch, seq, embed_dim), dtype=jnp.float32)
    query_in = jax.random.normal(kq, (batch, seq, embed_dim), dtype=jnp.float32)
    value_in = jax.random.normal(kv, (batch, seq, embed_dim), dtype=jnp.float32)

    # Deterministic parameters (shapes from nn.Linear in __init__).
    kp = jax.random.PRNGKey(42)
    k1, k2, k3, k4, k5 = jax.random.split(kp, 5)
    bh = 1.0 / math.sqrt(d_head)
    be = 1.0 / math.sqrt(embed_dim)
    params = {
        'w_q': jax.random.uniform(k1, (d_head, d_head), jnp.float32, -bh, bh),
        'w_k': jax.random.uniform(k2, (d_head, d_head), jnp.float32, -bh, bh),
        'w_v': jax.random.uniform(k3, (d_head, d_head), jnp.float32, -bh, bh),
        'w_out': jax.random.uniform(k4, (embed_dim, embed_dim), jnp.float32, -be, be),
        'b_out': jax.random.uniform(k5, (embed_dim,), jnp.float32, -be, be),
    }

    out = multi_head_attention(key_in, query_in, value_in, params, n_head)
    out = jax.block_until_ready(out)

    ref = _reference(key_in, query_in, value_in, params, n_head)
    assert out.shape == (batch, seq, embed_dim)
    # bf16 MXU inputs (f32 accumulation / f32 softmax) -> loosened tolerance
    # vs. the pure-f32 reference, as flagged in the perf review.
    assert jnp.allclose(out, ref, atol=4e-2, rtol=4e-2), "mismatch vs reference"

    print("KERNEL_OK")
</pallas_src>

<mosaic_0001>
module attributes {stable_mosaic.version = 11 : i64} {
  func.func @_mha_kernel(%arg0: i32, %arg1: memref<16x32xbf16, #tpu.memory_space<vmem>>, %arg2: memref<16x32xbf16, #tpu.memory_space<vmem>>, %arg3: memref<16x32xbf16, #tpu.memory_space<vmem>>, %arg4: memref<3x32x32xbf16, #tpu.memory_space<vmem>>, %arg5: memref<32x32xbf16, #tpu.memory_space<vmem>>, %arg6: memref<1x32xf32, #tpu.memory_space<vmem>>, %arg7: memref<16x32xf32, #tpu.memory_space<vmem>>) attributes {dimension_semantics = [#tpu.dimension_semantics<parallel>], iteration_bounds = array<i64: 1>, scalar_prefetch = 0 : i64, scratch_operands = 0 : i64, tpu.core_type = #tpu.core_type<tc>, window_params = [{transform_indices = @transform_0, window_bounds = array<i64: 16, 32>}, {transform_indices = @transform_1, window_bounds = array<i64: 16, 32>}, {transform_indices = @transform_2, window_bounds = array<i64: 16, 32>}, {pipeline_mode = #tpu.pipeline_mode<synchronous>, transform_indices = @transform_3, window_bounds = array<i64: 3, 32, 32>}, {pipeline_mode = #tpu.pipeline_mode<synchronous>, transform_indices = @transform_4, window_bounds = array<i64: 32, 32>}, {pipeline_mode = #tpu.pipeline_mode<synchronous>, transform_indices = @transform_5, window_bounds = array<i64: 1, 32>}, {transform_indices = @transform_6, window_bounds = array<i64: 16, 32>}]} {
    %c0 = arith.constant 0 : index
    %c0_0 = arith.constant 0 : index
    %0 = vector.load %arg1[%c0, %c0_0] : memref<16x32xbf16, #tpu.memory_space<vmem>>, vector<16x32xbf16>
    %c0_1 = arith.constant 0 : index
    %c0_2 = arith.constant 0 : index
    %1 = vector.load %arg2[%c0_1, %c0_2] : memref<16x32xbf16, #tpu.memory_space<vmem>>, vector<16x32xbf16>
    %c0_3 = arith.constant 0 : index
    %c0_4 = arith.constant 0 : index
    %2 = vector.load %arg3[%c0_3, %c0_4] : memref<16x32xbf16, #tpu.memory_space<vmem>>, vector<16x32xbf16>
    %c0_5 = arith.constant 0 : index
    %c0_6 = arith.constant 0 : index
    %c0_7 = arith.constant 0 : index
    %3 = vector.load %arg4[%c0_5, %c0_6, %c0_7] : memref<3x32x32xbf16, #tpu.memory_space<vmem>>, vector<1x32x32xbf16>
    %4 = vector.shape_cast %3 : vector<1x32x32xbf16> to vector<32x32xbf16>
    %cst = arith.constant dense<0.000000e+00> : vector<16x32xf32>
    %5 = tpu.matmul %0, %4, %cst {dimension_numbers = #tpu.dot_dimension_numbers<[1], [0], [0], [1], [0, 0, 1, 1], [], []>} : vector<16x32xbf16>, vector<32x32xbf16>, vector<16x32xf32> -> vector<16x32xf32>
    %c1 = arith.constant 1 : index
    %c0_8 = arith.constant 0 : index
    %c0_9 = arith.constant 0 : index
    %6 = vector.load %arg4[%c1, %c0_8, %c0_9] : memref<3x32x32xbf16, #tpu.memory_space<vmem>>, vector<1x32x32xbf16>
    %7 = vector.shape_cast %6 : vector<1x32x32xbf16> to vector<32x32xbf16>
    %cst_10 = arith.constant dense<0.000000e+00> : vector<16x32xf32>
    %8 = tpu.matmul %1, %7, %cst_10 {dimension_numbers = #tpu.dot_dimension_numbers<[1], [0], [0], [1], [0, 0, 1, 1], [], []>} : vector<16x32xbf16>, vector<32x32xbf16>, vector<16x32xf32> -> vector<16x32xf32>
    %c2 = arith.constant 2 : index
    %c0_11 = arith.constant 0 : index
    %c0_12 = arith.constant 0 : index
    %9 = vector.load %arg4[%c2, %c0_11, %c0_12] : memref<3x32x32xbf16, #tpu.memory_space<vmem>>, vector<1x32x32xbf16>
    %10 = vector.shape_cast %9 : vector<1x32x32xbf16> to vector<32x32xbf16>
    %cst_13 = arith.constant dense<0.000000e+00> : vector<16x32xf32>
    %11 = tpu.matmul %2, %10, %cst_13 {dimension_numbers = #tpu.dot_dimension_numbers<[1], [0], [0], [1], [0, 0, 1, 1], [], []>} : vector<16x32xbf16>, vector<32x32xbf16>, vector<16x32xf32> -> vector<16x32xf32>
    %12 = vector.extract_strided_slice %5 {offsets = [0, 0], sizes = [16, 8], strides = [1, 1]} : vector<16x32xf32> to vector<16x8xf32>
    %13 = vector.shape_cast %12 : vector<16x8xf32> to vector<2x8x8xf32>
    %14 = arith.truncf %13 : vector<2x8x8xf32> to vector<2x8x8xbf16>
    %15 = vector.extract_strided_slice %8 {offsets = [0, 0], sizes = [16, 8], strides = [1, 1]} : vector<16x32xf32> to vector<16x8xf32>
    %16 = vector.shape_cast %15 : vector<16x8xf32> to vector<2x8x8xf32>
    %17 = arith.truncf %16 : vector<2x8x8xf32> to vector<2x8x8xbf16>
    %18 = vector.extract_strided_slice %11 {offsets = [0, 0], sizes = [16, 8], strides = [1, 1]} : vector<16x32xf32> to vector<16x8xf32>
    %19 = vector.shape_cast %18 : vector<16x8xf32> to vector<2x8x8xf32>
    %20 = arith.truncf %19 : vector<2x8x8xf32> to vector<2x8x8xbf16>
    "tpu.trace_start"() <{level = 10 : i32, message = "bqd,bkd->bqk"}> : () -> ()
    %cst_14 = arith.constant dense<0.000000e+00> : vector<2x8x8xf32>
    %21 = tpu.matmul %14, %17, %cst_14 {dimension_numbers = #tpu.dot_dimension_numbers<[2], [2], [1], [1], [0, 0, 0, 1, 1, 1], [0], [0]>} : vector<2x8x8xbf16>, vector<2x8x8xbf16>, vector<2x8x8xf32> -> vector<2x8x8xf32>
    "tpu.trace_stop"() : () -> ()
    %cst_15 = arith.constant dense<0xFF800000> : vector<2x8xf32>
    %22 = vector.multi_reduction <maximumf>, %21, %cst_15 [2] : vector<2x8x8xf32> to vector<2x8xf32>
    %23 = vector.shape_cast %22 : vector<2x8xf32> to vector<2x8x1xf32>
    %24 = vector.broadcast %23 : vector<2x8x1xf32> to vector<2x8x8xf32>
    %25 = arith.subf %21, %24 : vector<2x8x8xf32>
    %26 = math.exp %25 : vector<2x8x8xf32>
    %cst_16 = arith.constant dense<0.000000e+00> : vector<2x8xf32>
    %27 = vector.multi_reduction <add>, %26, %cst_16 [2] : vector<2x8x8xf32> to vector<2x8xf32>
    %28 = vector.shape_cast %27 : vector<2x8xf32> to vector<2x8x1xf32>
    %29 = tpu.reciprocal %28 {approx = true} : vector<2x8x1xf32> -> vector<2x8x1xf32>
    %30 = vector.broadcast %29 : vector<2x8x1xf32> to vector<2x8x8xf32>
    %31 = arith.mulf %26, %30 : vector<2x8x8xf32>
    %32 = arith.truncf %31 : vector<2x8x8xf32> to vector<2x8x8xbf16>
    "tpu.trace_start"() <{level = 10 : i32, message = "bqk,bkd->bqd"}> : () -> ()
    %cst_17 = arith.constant dense<0.000000e+00> : vector<2x8x8xf32>
    %33 = tpu.matmul %32, %20, %cst_17 {dimension_numbers = #tpu.dot_dimension_numbers<[2], [1], [1], [2], [0, 0, 0, 1, 1, 2], [0], [0]>} : vector<2x8x8xbf16>, vector<2x8x8xbf16>, vector<2x8x8xf32> -> vector<2x8x8xf32>
    "tpu.trace_stop"() : () -> ()
    %34 = vector.shape_cast %33 : vector<2x8x8xf32> to vector<16x8xf32>
    %35 = vector.extract_strided_slice %5 {offsets = [0, 8], sizes = [16, 8], strides = [1, 1]} : vector<16x32xf32> to vector<16x8xf32>
    %36 = vector.shape_cast %35 : vector<16x8xf32> to vector<2x8x8xf32>
    %37 = arith.truncf %36 : vector<2x8x8xf32> to vector<2x8x8xbf16>
    %38 = vector.extract_strided_slice %8 {offsets = [0, 8], sizes = [16, 8], strides = [1, 1]} : vector<16x32xf32> to vector<16x8xf32>
    %39 = vector.shape_cast %38 : vector<16x8xf32> to vector<2x8x8xf32>
    %40 = arith.truncf %39 : vector<2x8x8xf32> to vector<2x8x8xbf16>
    %41 = vector.extract_strided_slice %11 {offsets = [0, 8], sizes = [16, 8], strides = [1, 1]} : vector<16x32xf32> to vector<16x8xf32>
    %42 = vector.shape_cast %41 : vector<16x8xf32> to vector<2x8x8xf32>
    %43 = arith.truncf %42 : vector<2x8x8xf32> to vector<2x8x8xbf16>
    "tpu.trace_start"() <{level = 10 : i32, message = "bqd,bkd->bqk"}> : () -> ()
    %cst_18 = arith.constant dense<0.000000e+00> : vector<2x8x8xf32>
    %44 = tpu.matmul %37, %40, %cst_18 {dimension_numbers = #tpu.dot_dimension_numbers<[2], [2], [1], [1], [0, 0, 0, 1, 1, 1], [0], [0]>} : vector<2x8x8xbf16>, vector<2x8x8xbf16>, vector<2x8x8xf32> -> vector<2x8x8xf32>
    "tpu.trace_stop"() : () -> ()
    %cst_19 = arith.constant dense<0xFF800000> : vector<2x8xf32>
    %45 = vector.multi_reduction <maximumf>, %44, %cst_19 [2] : vector<2x8x8xf32> to vector<2x8xf32>
    %46 = vector.shape_cast %45 : vector<2x8xf32> to vector<2x8x1xf32>
    %47 = vector.broadcast %46 : vector<2x8x1xf32> to vector<2x8x8xf32>
    %48 = arith.subf %44, %47 : vector<2x8x8xf32>
    %49 = math.exp %48 : vector<2x8x8xf32>
    %cst_20 = arith.constant dense<0.000000e+00> : vector<2x8xf32>
    %50 = vector.multi_reduction <add>, %49, %cst_20 [2] : vector<2x8x8xf32> to vector<2x8xf32>
    %51 = vector.shape_cast %50 : vector<2x8xf32> to vector<2x8x1xf32>
    %52 = tpu.reciprocal %51 {approx = true} : vector<2x8x1xf32> -> vector<2x8x1xf32>
    %53 = vector.broadcast %52 : vector<2x8x1xf32> to vector<2x8x8xf32>
    %54 = arith.mulf %49, %53 : vector<2x8x8xf32>
    %55 = arith.truncf %54 : vector<2x8x8xf32> to vector<2x8x8xbf16>
    "tpu.trace_start"() <{level = 10 : i32, message = "bqk,bkd->bqd"}> : () -> ()
    %cst_21 = arith.constant dense<0.000000e+00> : vector<2x8x8xf32>
    %56 = tpu.matmul %55, %43, %cst_21 {dimension_numbers = #tpu.dot_dimension_numbers<[2], [1], [1], [2], [0, 0, 0, 1, 1, 2], [0], [0]>} : vector<2x8x8xbf16>, vector<2x8x8xbf16>, vector<2x8x8xf32> -> vector<2x8x8xf32>
    "tpu.trace_stop"() : () -> ()
    %57 = vector.shape_cast %56 : vector<2x8x8xf32> to vector<16x8xf32>
    %58 = vector.extract_strided_slice %5 {offsets = [0, 16], sizes = [16, 8], strides = [1, 1]} : vector<16x32xf32> to vector<16x8xf32>
    %59 = vector.shape_cast %58 : vector<16x8xf32> to vector<2x8x8xf32>
    %60 = arith.truncf %59 : vector<2x8x8xf32> to vector<2x8x8xbf16>
    %61 = vector.extract_strided_slice %8 {offsets = [0, 16], sizes = [16, 8], strides = [1, 1]} : vector<16x32xf32> to vector<16x8xf32>
    %62 = vector.shape_cast %61 : vector<16x8xf32> to vector<2x8x8xf32>
    %63 = arith.truncf %62 : vector<2x8x8xf32> to vector<2x8x8xbf16>
    %64 = vector.extract_strided_slice %11 {offsets = [0, 16], sizes = [16, 8], strides = [1, 1]} : vector<16x32xf32> to vector<16x8xf32>
    %65 = vector.shape_cast %64 : vector<16x8xf32> to vector<2x8x8xf32>
    %66 = arith.truncf %65 : vector<2x8x8xf32> to vector<2x8x8xbf16>
    "tpu.trace_start"() <{level = 10 : i32, message = "bqd,bkd->bqk"}> : () -> ()
    %cst_22 = arith.constant dense<0.000000e+00> : vector<2x8x8xf32>
    %67 = tpu.matmul %60, %63, %cst_22 {dimension_numbers = #tpu.dot_dimension_numbers<[2], [2], [1], [1], [0, 0, 0, 1, 1, 1], [0], [0]>} : vector<2x8x8xbf16>, vector<2x8x8xbf16>, vector<2x8x8xf32> -> vector<2x8x8xf32>
    "tpu.trace_stop"() : () -> ()
    %cst_23 = arith.constant dense<0xFF800000> : vector<2x8xf32>
    %68 = vector.multi_reduction <maximumf>, %67, %cst_23 [2] : vector<2x8x8xf32> to vector<2x8xf32>
    %69 = vector.shape_cast %68 : vector<2x8xf32> to vector<2x8x1xf32>
    %70 = vector.broadcast %69 : vector<2x8x1xf32> to vector<2x8x8xf32>
    %71 = arith.subf %67, %70 : vector<2x8x8xf32>
    %72 = math.exp %71 : vector<2x8x8xf32>
    %cst_24 = arith.constant dense<0.000000e+00> : vector<2x8xf32>
    %73 = vector.multi_reduction <add>, %72, %cst_24 [2] : vector<2x8x8xf32> to vector<2x8xf32>
    %74 = vector.shape_cast %73 : vector<2x8xf32> to vector<2x8x1xf32>
    %75 = tpu.reciprocal %74 {approx = true} : vector<2x8x1xf32> -> vector<2x8x1xf32>
    %76 = vector.broadcast %75 : vector<2x8x1xf32> to vector<2x8x8xf32>
    %77 = arith.mulf %72, %76 : vector<2x8x8xf32>
    %78 = arith.truncf %77 : vector<2x8x8xf32> to vector<2x8x8xbf16>
    "tpu.trace_start"() <{level = 10 : i32, message = "bqk,bkd->bqd"}> : () -> ()
    %cst_25 = arith.constant dense<0.000000e+00> : vector<2x8x8xf32>
    %79 = tpu.matmul %78, %66, %cst_25 {dimension_numbers = #tpu.dot_dimension_numbers<[2], [1], [1], [2], [0, 0, 0, 1, 1, 2], [0], [0]>} : vector<2x8x8xbf16>, vector<2x8x8xbf16>, vector<2x8x8xf32> -> vector<2x8x8xf32>
    "tpu.trace_stop"() : () -> ()
    %80 = vector.shape_cast %79 : vector<2x8x8xf32> to vector<16x8xf32>
    %81 = vector.extract_strided_slice %5 {offsets = [0, 24], sizes = [16, 8], strides = [1, 1]} : vector<16x32xf32> to vector<16x8xf32>
    %82 = vector.shape_cast %81 : vector<16x8xf32> to vector<2x8x8xf32>
    %83 = arith.truncf %82 : vector<2x8x8xf32> to vector<2x8x8xbf16>
    %84 = vector.extract_strided_slice %8 {offsets = [0, 24], sizes = [16, 8], strides = [1, 1]} : vector<16x32xf32> to vector<16x8xf32>
    %85 = vector.shape_cast %84 : vector<16x8xf32> to vector<2x8x8xf32>
    %86 = arith.truncf %85 : vector<2x8x8xf32> to vector<2x8x8xbf16>
    %87 = vector.extract_strided_slice %11 {offsets = [0, 24], sizes = [16, 8], strides = [1, 1]} : vector<16x32xf32> to vector<16x8xf32>
    %88 = vector.shape_cast %87 : vector<16x8xf32> to vector<2x8x8xf32>
    %89 = arith.truncf %88 : vector<2x8x8xf32> to vector<2x8x8xbf16>
    "tpu.trace_start"() <{level = 10 : i32, message = "bqd,bkd->bqk"}> : () -> ()
    %cst_26 = arith.constant dense<0.000000e+00> : vector<2x8x8xf32>
    %90 = tpu.matmul %83, %86, %cst_26 {dimension_numbers = #tpu.dot_dimension_numbers<[2], [2], [1], [1], [0, 0, 0, 1, 1, 1], [0], [0]>} : vector<2x8x8xbf16>, vector<2x8x8xbf16>, vector<2x8x8xf32> -> vector<2x8x8xf32>
    "tpu.trace_stop"() : () -> ()
    %cst_27 = arith.constant dense<0xFF800000> : vector<2x8xf32>
    %91 = vector.multi_reduction <maximumf>, %90, %cst_27 [2] : vector<2x8x8xf32> to vector<2x8xf32>
    %92 = vector.shape_cast %91 : vector<2x8xf32> to vector<2x8x1xf32>
    %93 = vector.broadcast %92 : vector<2x8x1xf32> to vector<2x8x8xf32>
    %94 = arith.subf %90, %93 : vector<2x8x8xf32>
    %95 = math.exp %94 : vector<2x8x8xf32>
    %cst_28 = arith.constant dense<0.000000e+00> : vector<2x8xf32>
    %96 = vector.multi_reduction <add>, %95, %cst_28 [2] : vector<2x8x8xf32> to vector<2x8xf32>
    %97 = vector.shape_cast %96 : vector<2x8xf32> to vector<2x8x1xf32>
    %98 = tpu.reciprocal %97 {approx = true} : vector<2x8x1xf32> -> vector<2x8x1xf32>
    %99 = vector.broadcast %98 : vector<2x8x1xf32> to vector<2x8x8xf32>
    %100 = arith.mulf %95, %99 : vector<2x8x8xf32>
    %101 = arith.truncf %100 : vector<2x8x8xf32> to vector<2x8x8xbf16>
    "tpu.trace_start"() <{level = 10 : i32, message = "bqk,bkd->bqd"}> : () -> ()
    %cst_29 = arith.constant dense<0.000000e+00> : vector<2x8x8xf32>
    %102 = tpu.matmul %101, %89, %cst_29 {dimension_numbers = #tpu.dot_dimension_numbers<[2], [1], [1], [2], [0, 0, 0, 1, 1, 2], [0], [0]>} : vector<2x8x8xbf16>, vector<2x8x8xbf16>, vector<2x8x8xf32> -> vector<2x8x8xf32>
    "tpu.trace_stop"() : () -> ()
    %103 = vector.shape_cast %102 : vector<2x8x8xf32> to vector<16x8xf32>
    %104 = tpu.concatenate %34, %57, %80, %103 in 1 : vector<16x8xf32>, vector<16x8xf32>, vector<16x8xf32>, vector<16x8xf32> -> vector<16x32xf32>
    %105 = arith.truncf %104 : vector<16x32xf32> to vector<16x32xbf16>
    %c0_30 = arith.constant 0 : index
    %c0_31 = arith.constant 0 : index
    %106 = vector.load %arg5[%c0_30, %c0_31] : memref<32x32xbf16, #tpu.memory_space<vmem>>, vector<32x32xbf16>
    %cst_32 = arith.constant dense<0.000000e+00> : vector<16x32xf32>
    %107 = tpu.matmul %105, %106, %cst_32 {dimension_numbers = #tpu.dot_dimension_numbers<[1], [0], [0], [1], [0, 0, 1, 1], [], []>} : vector<16x32xbf16>, vector<32x32xbf16>, vector<16x32xf32> -> vector<16x32xf32>
    %c0_33 = arith.constant 0 : index
    %c0_34 = arith.constant 0 : index
    %108 = vector.load %arg6[%c0_33, %c0_34] : memref<1x32xf32, #tpu.memory_space<vmem>>, vector<1x32xf32>
    %109 = vector.broadcast %108 : vector<1x32xf32> to vector<16x32xf32>
    %110 = arith.addf %107, %109 : vector<16x32xf32>
    %c0_35 = arith.constant 0 : index
    %c0_36 = arith.constant 0 : index
    %111 = vector.load %arg7[%c0_35, %c0_36] : memref<16x32xf32, #tpu.memory_space<vmem>>, vector<16x32xf32>
    tpu.vector_store %arg7[%c0_35, %c0_36], %110 {strides = array<i32>} : memref<16x32xf32, #tpu.memory_space<vmem>>, vector<16x32xf32>,
    return
  }
  func.func @transform_0(%arg0: i32) -> (i32, i32) {
    %c0_i32 = arith.constant 0 : i32
    %c0_i32_0 = arith.constant 0 : i32
    return %arg0, %c0_i32 : i32, i32
  }
  func.func @transform_1(%arg0: i32) -> (i32, i32) {
    %c0_i32 = arith.constant 0 : i32
    %c0_i32_0 = arith.constant 0 : i32
    return %arg0, %c0_i32 : i32, i32
  }
  func.func @transform_2(%arg0: i32) -> (i32, i32) {
    %c0_i32 = arith.constant 0 : i32
    %c0_i32_0 = arith.constant 0 : i32
    return %arg0, %c0_i32 : i32, i32
  }
  func.func @transform_3(%arg0: i32) -> (i32, i32, i32) {
    %c0_i32 = arith.constant 0 : i32
    %c0_i32_0 = arith.constant 0 : i32
    %c0_i32_1 = arith.constant 0 : i32
    %c0_i32_2 = arith.constant 0 : i32
    return %c0_i32, %c0_i32_0, %c0_i32_1 : i32, i32, i32
  }
  func.func @transform_4(%arg0: i32) -> (i32, i32) {
    %c0_i32 = arith.constant 0 : i32
    %c0_i32_0 = arith.constant 0 : i32
    %c0_i32_1 = arith.constant 0 : i32
    return %c0_i32, %c0_i32_0 : i32, i32
  }
  func.func @transform_5(%arg0: i32) -> (i32, i32) {
    %c0_i32 = arith.constant 0 : i32
    %c0_i32_0 = arith.constant 0 : i32
    %c0_i32_1 = arith.constant 0 : i32
    return %c0_i32, %c0_i32_0 : i32, i32
  }
  func.func @transform_6(%arg0: i32) -> (i32, i32) {
    %c0_i32 = arith.constant 0 : i32
    %c0_i32_0 = arith.constant 0 : i32
    return %arg0, %c0_i32 : i32, i32
  }
}

</mosaic_0001>

<llo_original>
// kernel: tpu_custom_call.1
$region0: #{tpu_custom_call.1}
  #allocation0 [shape = 'u32[]', space=smem, size = 0x4, offset = 0x4, fixed_abs, tag = 'smem constant byte address 0x4 - core index']
  #allocation1 [shape = 'u32[144,128]{1,0:T(1,128)}', space=vmem, size = 0x12000, scoped, tag = 'internal scratch']
  %s0 = inlined_call_operand.hbm [shape: bf16[16,32], index: 0, kind: input, shape index: {}]
  %s1 = inlined_call_operand.hbm [shape: bf16[16,32], index: 1, kind: input, shape index: {}]
  %s2 = inlined_call_operand.hbm [shape: bf16[16,32], index: 2, kind: input, shape index: {}]
  %s3 = inlined_call_operand.hbm [shape: bf16[3,32,32], index: 3, kind: input, shape index: {}]
  %s4 = inlined_call_operand.hbm [shape: bf16[32,32], index: 4, kind: input, shape index: {}]
  %s5 = inlined_call_operand.vmem [shape: f32[1,32], index: 5, kind: input, shape index: {}]
  %s6 = inlined_call_operand.hbm [shape: f32[16,32], index: 6, kind: output, shape index: {}]
  %s7 = sld [smem:[#allocation0]]
  $region54: #{tpu_custom_call.1} parent=0
    _
  %s9 = ssub.s32 1, %s7
  %s10 = scalar_select 0, %s9, %s7
  $region1: #{tpu_custom_call.1} parent=0
    #allocation2 [shape = 'u8[4096]{0}', space=vmem, size = 0x1000, scoped, tag = 'input window, operand 0, single buffered']
    #allocation3 [shape = 's32[1]{0}', space=sflag, size = 0x4, scoped, tag = 'scoped memory for tpu_custom_call.1']
    #allocation4 [shape = 's32[1]{0}', space=sflag, size = 0x4, scoped, tag = 'scoped memory for tpu_custom_call.1']
    #allocation5 [shape = 'u8[4096]{0}', space=vmem, size = 0x1000, scoped, tag = 'input window, operand 1, single buffered']
    #allocation6 [shape = 's32[1]{0}', space=sflag, size = 0x4, scoped, tag = 'scoped memory for tpu_custom_call.1']
    #allocation7 [shape = 'u8[4096]{0}', space=vmem, size = 0x1000, scoped, tag = 'input window, operand 2, single buffered']
    #allocation8 [shape = 'u8[24576]{0}', space=vmem, size = 0x6000, scoped, tag = 'input window, operand 3, single buffered']
    #allocation9 [shape = 's32[1]{0}', space=sflag, size = 0x4, scoped, tag = 'scoped memory for tpu_custom_call.1']
    #allocation10 [shape = 'u8[8192]{0}', space=vmem, size = 0x2000, scoped, tag = 'input window, operand 4, single buffered']
    #allocation11 [shape = 'u8[8192]{0}', space=vmem, size = 0x2000, scoped, tag = 'output window, operand 0, single buffered']
    %11 = vsyncpa [#allocation3], 0
    %12 = vsyncpa [#allocation6], 0
    %13 = vsyncpa [#allocation9], 0
    %14 = vsyncpa [#allocation4], 0
    // Predicated region
    $region2: #{tpu_custom_call.1} parent=1 // pred_check
      _
    $region3: #{tpu_custom_call.1} parent=1 // pred_check_branch
      %16 = sbr.rel (0) target = $region5
    $region4: #{tpu_custom_call.1} parent=1 // pred_region
      %s18 = ssub.s32 128, 128
      %19 = vsyncadd [#allocation3], %s18
      %s20 = sshll.u32 [#allocation2], 4
      %s21 = int_to_ptr.vmem [resolvable:$true] %s20
      %26 = dma.hbm_to_vmem [thread:$0]  %s0, 128, %s21, [#allocation3], 64, 64, 4
    $region5: #{tpu_custom_call.1} parent=1 // pred_fallthru
      _
    // Predicated region
    $region6: #{tpu_custom_call.1} parent=1 // pred_check
      _
    $region7: #{tpu_custom_call.1} parent=1 // pred_check_branch
      %28 = sbr.rel (0) target = $region9
    $region8: #{tpu_custom_call.1} parent=1 // pred_region
      %s30 = ssub.s32 128, 128
      %31 = vsyncadd [#allocation6], %s30
      %s32 = sshll.u32 [#allocation5], 4
      %s33 = int_to_ptr.vmem [resolvable:$true] %s32
      %38 = dma.hbm_to_vmem [thread:$0]  %s1, 128, %s33, [#allocation6], 64, 64, 4
    $region9: #{tpu_custom_call.1} parent=1 // pred_fallthru
      _
    // Predicated region
    $region10: #{tpu_custom_call.1} parent=1 // pred_check
      _
    $region11: #{tpu_custom_call.1} parent=1 // pred_check_branch
      %40 = sbr.rel (0) target = $region13
    $region12: #{tpu_custom_call.1} parent=1 // pred_region
      %s42 = ssub.s32 128, 128
      %43 = vsyncadd [#allocation6], %s42
      %s44 = sshll.u32 [#allocation7], 4
      %s45 = int_to_ptr.vmem [resolvable:$true] %s44
      %50 = dma.hbm_to_vmem [thread:$0]  %s2, 128, %s45, [#allocation6], 64, 64, 4
    $region13: #{tpu_custom_call.1} parent=1 // pred_fallthru
      _
    // Predicated region
    $region14: #{tpu_custom_call.1} parent=1 // pred_check
      _
    $region15: #{tpu_custom_call.1} parent=1 // pred_check_branch
      %52 = sbr.rel (0) target = $region17
    $region16: #{tpu_custom_call.1} parent=1 // pred_region
      %s54 = ssub.s32 768, 768
      %55 = vsyncadd [#allocation9], %s54
      %s56 = sshll.u32 [#allocation8], 4
      %s57 = int_to_ptr.vmem [resolvable:$true] %s56
      %62 = dma.hbm_to_vmem [thread:$0]  %s3, 768, %s57, [#allocation9], 64, 64, 4
    $region17: #{tpu_custom_call.1} parent=1 // pred_fallthru
      _
    // Predicated region
    $region18: #{tpu_custom_call.1} parent=1 // pred_check
      _
    $region19: #{tpu_custom_call.1} parent=1 // pred_check_branch
      %64 = sbr.rel (0) target = $region21
    $region20: #{tpu_custom_call.1} parent=1 // pred_region
      %s66 = ssub.s32 256, 256
      %67 = vsyncadd [#allocation9], %s66
      %s68 = sshll.u32 [#allocation10], 4
      %s69 = int_to_ptr.vmem [resolvable:$true] %s68
      %74 = dma.hbm_to_vmem [thread:$0]  %s4, 256, %s69, [#allocation9], 64, 64, 4
    $region21: #{tpu_custom_call.1} parent=1 // pred_fallthru
      _
    // Predicated region
    $region22: #{tpu_custom_call.1} parent=1 // pred_check
      _
    $region23: #{tpu_custom_call.1} parent=1 // pred_check_branch
      %76 = sbr.rel (0) target = $region25
    $region24: #{tpu_custom_call.1} parent=1 // pred_region
      _
    $region25: #{tpu_custom_call.1} parent=1 // pred_fallthru
      _
    // Predicated region
    $region26: #{tpu_custom_call.1} parent=1 // pred_check
      _
    $region27: #{tpu_custom_call.1} parent=1 // pred_check_branch
      %78 = sbr.rel (0) target = $region29
    $region28: #{tpu_custom_call.1} parent=1 // pred_region
      %79 = dma.done [#allocation3], 128
    $region29: #{tpu_custom_call.1} parent=1 // pred_fallthru
      _
    // Predicated region
    $region30: #{tpu_custom_call.1} parent=1 // pred_check
      _
    $region31: #{tpu_custom_call.1} parent=1 // pred_check_branch
      %81 = sbr.rel (0) target = $region33
    $region32: #{tpu_custom_call.1} parent=1 // pred_region
      %82 = dma.done [#allocation6], 128
    $region33: #{tpu_custom_call.1} parent=1 // pred_fallthru
      _
    // Predicated region
    $region34: #{tpu_custom_call.1} parent=1 // pred_check
      _
    $region35: #{tpu_custom_call.1} parent=1 // pred_check_branch
      %84 = sbr.rel (0) target = $region37
    $region36: #{tpu_custom_call.1} parent=1 // pred_region
      %85 = dma.done [#allocation6], 128
    $region37: #{tpu_custom_call.1} parent=1 // pred_fallthru
      _
    // Predicated region
    $region38: #{tpu_custom_call.1} parent=1 // pred_check
      _
    $region39: #{tpu_custom_call.1} parent=1 // pred_check_branch
      %87 = sbr.rel (0) target = $region41
    $region40: #{tpu_custom_call.1} parent=1 // pred_region
      %88 = dma.done [#allocation9], 768
    $region41: #{tpu_custom_call.1} parent=1 // pred_fallthru
      _
    // Predicated region
    $region42: #{tpu_custom_call.1} parent=1 // pred_check
      _
    $region43: #{tpu_custom_call.1} parent=1 // pred_check_branch
      %90 = sbr.rel (0) target = $region45
    $region44: #{tpu_custom_call.1} parent=1 // pred_region
      %91 = dma.done [#allocation9], 256
    $region45: #{tpu_custom_call.1} parent=1 // pred_fallthru
      _
    %v93 = vld [vmem:[#allocation2] sm:$0xf]
    %v94 = vld [vmem:[#allocation2 + $0x4] sm:$0xf]
    %v95 = vld [vmem:[#allocation5] sm:$0xf]
    %v96 = vld [vmem:[#allocation5 + $0x4] sm:$0xf]
    %v97 = vld [vmem:[#allocation7] sm:$0xf]
    %v98 = vld [vmem:[#allocation7 + $0x4] sm:$0xf]
    %v99 = vld [vmem:[#allocation8] sm:$0xf]
    %v100 = vld [vmem:[#allocation8 + $0x4] sm:$0xf]
    %v101 = vld [vmem:[#allocation8 + $0x8] sm:$0xf]
    %v102 = vld [vmem:[#allocation8 + $0xc] sm:$0xf]
    %v105 = vunpack.c.l.b16 %v93
    %v106 = vunpack.c.l.b16 %v94
    %v107 = vpack.c.b16 %v106, %v105
    %v112 = vunpack.c.l.b16 %v99
    %v113 = vunpack.c.l.b16 %v100
    %v114 = vunpack.c.l.b16 %v101
    %v115 = vunpack.c.l.b16 %v102
    %v116 = vpack.c.b16 %v113, %v112
    %v117 = vpack.c.b16 %v115, %v114
    %vm120 = vcmask 261120
    %v122 = vsel %vm120, %v107, 0
    %124 = vmatprep.subr.bf16.mxu0 0
    %125 = vmatpush1.bf16.msra.mxu0 %v116
    %126 = vmatprep.subr.bf16.mxu0 0
    %127 = vmatpush1.bf16.msra.mxu0 %v117
    %128 = vmatprep.subr.bf16.mxu0 0
    %129 = vmatpush1.bf16.msra.mxu0 0
    %130 = vmatprep.subr.bf16.mxu0 0
    %131 = vmatpush1.bf16.msra.mxu0 0
    %132 = vmatprep.subr.bf16.mxu0 0
    %133 = vmatpush1.bf16.msra.mxu0 0
    %134 = vmatprep.subr.bf16.mxu0 0
    %135 = vmatpush1.bf16.msra.mxu0 0
    %136 = vmatprep.subr.bf16.mxu0 0
    %137 = vmatpush1.bf16.msra.mxu0 0
    %138 = vmatprep.subr.bf16.mxu0 0
    %139 = vmatpush1.bf16.msra.mxu0 0
    %140 = vmatprep.subr.bf16.mxu0 0
    %141 = vmatpush1.bf16.msra.mxu0 0
    %142 = vmatprep.subr.bf16.mxu0 0
    %143 = vmatpush1.bf16.msra.mxu0 0
    %144 = vmatprep.subr.bf16.mxu0 0
    %145 = vmatpush1.bf16.msra.mxu0 0
    %146 = vmatprep.subr.bf16.mxu0 0
    %147 = vmatpush1.bf16.msra.mxu0 0
    %148 = vmatprep.subr.bf16.mxu0 0
    %149 = vmatpush1.bf16.msra.mxu0 0
    %150 = vmatprep.subr.bf16.mxu0 0
    %151 = vmatpush1.bf16.msra.mxu0 0
    %152 = vmatprep.subr.bf16.mxu0 0
    %153 = vmatpush1.bf16.msra.mxu0 0
    %154 = vmatprep.subr.bf16.mxu0 0
    %155 = vmatpush1.bf16.msra.mxu0 0
    %156 = vmatprep.mubr.bf16.mxu0 0
    %157 = vmatmul.mubr.bf16.gmra.mrb[0].mxu0 %v122
    %v158 = vpop.f32.mrb[0].mxu0
    %v159 = vadd.f32 0.0, %v158
    %v160 = vpop.f32.mrb[0].mxu0
    %v161 = vpop.f32.mrb[0].mxu0
    %v162 = vadd.f32 0.0, %v161
    %v163 = vpop.f32.mrb[0].mxu0
    %164 = vdwg.mxu0
    %s165 = scalar_lea.vmem [#allocation8], 16
    %v166 = vld [vmem:[%s165] sm:$0xf]
    %v167 = vld [vmem:[%s165 + $0x4] sm:$0xf]
    %v168 = vld [vmem:[%s165 + $0x8] sm:$0xf]
    %v169 = vld [vmem:[%s165 + $0xc] sm:$0xf]
    %v172 = vunpack.c.l.b16 %v95
    %v173 = vunpack.c.l.b16 %v96
    %v174 = vpack.c.b16 %v173, %v172
    %v179 = vunpack.c.l.b16 %v166
    %v180 = vunpack.c.l.b16 %v167
    %v181 = vunpack.c.l.b16 %v168
    %v182 = vunpack.c.l.b16 %v169
    %v183 = vpack.c.b16 %v180, %v179
    %v184 = vpack.c.b16 %v182, %v181
    %v188 = vsel %vm120, %v174, 0
    %190 = vmatprep.subr.bf16.mxu0 0
    %191 = vmatpush1.bf16.msra.mxu0 %v183
    %192 = vmatprep.subr.bf16.mxu0 0
    %193 = vmatpush1.bf16.msra.mxu0 %v184
    %194 = vmatprep.subr.bf16.mxu0 0
    %195 = vmatpush1.bf16.msra.mxu0 0
    %196 = vmatprep.subr.bf16.mxu0 0
    %197 = vmatpush1.bf16.msra.mxu0 0
    %198 = vmatprep.subr.bf16.mxu0 0
    %199 = vmatpush1.bf16.msra.mxu0 0
    %200 = vmatprep.subr.bf16.mxu0 0
    %201 = vmatpush1.bf16.msra.mxu0 0
    %202 = vmatprep.subr.bf16.mxu0 0
    %203 = vmatpush1.bf16.msra.mxu0 0
    %204 = vmatprep.subr.bf16.mxu0 0
    %205 = vmatpush1.bf16.msra.mxu0 0
    %206 = vmatprep.subr.bf16.mxu0 0
    %207 = vmatpush1.bf16.msra.mxu0 0
    %208 = vmatprep.subr.bf16.mxu0 0
    %209 = vmatpush1.bf16.msra.mxu0 0
    %210 = vmatprep.subr.bf16.mxu0 0
    %211 = vmatpush1.bf16.msra.mxu0 0
    %212 = vmatprep.subr.bf16.mxu0 0
    %213 = vmatpush1.bf16.msra.mxu0 0
    %214 = vmatprep.subr.bf16.mxu0 0
    %215 = vmatpush1.bf16.msra.mxu0 0
    %216 = vmatprep.subr.bf16.mxu0 0
    %217 = vmatpush1.bf16.msra.mxu0 0
    %218 = vmatprep.subr.bf16.mxu0 0
    %219 = vmatpush1.bf16.msra.mxu0 0
    %220 = vmatprep.subr.bf16.mxu0 0
    %221 = vmatpush1.bf16.msra.mxu0 0
    %222 = vmatprep.mubr.bf16.mxu0 0
    %223 = vmatmul.mubr.bf16.gmra.mrb[0].mxu0 %v188
    %v224 = vpop.f32.mrb[0].mxu0
    %v225 = vadd.f32 0.0, %v224
    %v226 = vpop.f32.mrb[0].mxu0
    %v227 = vpop.f32.mrb[0].mxu0
    %v228 = vadd.f32 0.0, %v227
    %v229 = vpop.f32.mrb[0].mxu0
    %230 = vdwg.mxu0
    %s231 = scalar_lea.vmem [#allocation8], 32
    %v232 = vld [vmem:[%s231] sm:$0xf]
    %v233 = vld [vmem:[%s231 + $0x4] sm:$0xf]
    %v234 = vld [vmem:[%s231 + $0x8] sm:$0xf]
    %v235 = vld [vmem:[%s231 + $0xc] sm:$0xf]
    %v238 = vunpack.c.l.b16 %v97
    %v239 = vunpack.c.l.b16 %v98
    %v240 = vpack.c.b16 %v239, %v238
    %v245 = vunpack.c.l.b16 %v232
    %v246 = vunpack.c.l.b16 %v233
    %v247 = vunpack.c.l.b16 %v234
    %v248 = vunpack.c.l.b16 %v235
    %v249 = vpack.c.b16 %v246, %v245
    %v250 = vpack.c.b16 %v248, %v247
    %v254 = vsel %vm120, %v240, 0
    %256 = vmatprep.subr.bf16.mxu0 0
    %257 = vmatpush1.bf16.msra.mxu0 %v249
    %258 = vmatprep.subr.bf16.mxu0 0
    %259 = vmatpush1.bf16.msra.mxu0 %v250
    %260 = vmatprep.subr.bf16.mxu0 0
    %261 = vmatpush1.bf16.msra.mxu0 0
    %262 = vmatprep.subr.bf16.mxu0 0
    %263 = vmatpush1.bf16.msra.mxu0 0
    %264 = vmatprep.subr.bf16.mxu0 0
    %265 = vmatpush1.bf16.msra.mxu0 0
    %266 = vmatprep.subr.bf16.mxu0 0
    %267 = vmatpush1.bf16.msra.mxu0 0
    %268 = vmatprep.subr.bf16.mxu0 0
    %269 = vmatpush1.bf16.msra.mxu0 0
    %270 = vmatprep.subr.bf16.mxu0 0
    %271 = vmatpush1.bf16.msra.mxu0 0
    %272 = vmatprep.subr.bf16.mxu0 0
    %273 = vmatpush1.bf16.msra.mxu0 0
    %274 = vmatprep.subr.bf16.mxu0 0
    %275 = vmatpush1.bf16.msra.mxu0 0
    %276 = vmatprep.subr.bf16.mxu0 0
    %277 = vmatpush1.bf16.msra.mxu0 0
    %278 = vmatprep.subr.bf16.mxu0 0
    %279 = vmatpush1.bf16.msra.mxu0 0
    %280 = vmatprep.subr.bf16.mxu0 0
    %281 = vmatpush1.bf16.msra.mxu0 0
    %282 = vmatprep.subr.bf16.mxu0 0
    %283 = vmatpush1.bf16.msra.mxu0 0
    %284 = vmatprep.subr.bf16.mxu0 0
    %285 = vmatpush1.bf16.msra.mxu0 0
    %286 = vmatprep.subr.bf16.mxu0 0
    %287 = vmatpush1.bf16.msra.mxu0 0
    %288 = vmatprep.mubr.bf16.mxu0 0
    %289 = vmatmul.mubr.bf16.gmra.mrb[0].mxu0 %v254
    %v290 = vpop.f32.mrb[0].mxu0
    %v291 = vadd.f32 0.0, %v290
    %v292 = vpop.f32.mrb[0].mxu0
    %v293 = vpop.f32.mrb[0].mxu0
    %v294 = vadd.f32 0.0, %v293
    %v295 = vpop.f32.mrb[0].mxu0
    %296 = vdwg.mxu0
    %v297 = vpack.c.bf16 %v159, %v159
    %v298 = vpack.c.bf16 %v162, %v162
    %v299 = vpack.c.bf16 %v225, %v225
    %v300 = vpack.c.bf16 %v228, %v228
    %v301 = vpack.c.bf16 %v291, %v291
    %v302 = vpack.c.bf16 %v294, %v294
    %vm303 = vcmask 64512
    %v305 = vsel %vm303, %v297, 0
    %v308 = vsel %vm303, %v299, 0
    %310 = vmatprep.subr.bf16.mxu0 0
    %311 = vmatpush1.bf16.xpose.msra.mxu0 %v308
    %312 = vmatprep.subr.bf16.mxu0 0
    %313 = vmatpush1.bf16.xpose.msra.mxu0 0
    %314 = vmatprep.subr.bf16.mxu0 0
    %315 = vmatpush1.bf16.xpose.msra.mxu0 0
    %316 = vmatprep.subr.bf16.mxu0 0
    %317 = vmatpush1.bf16.xpose.msra.mxu0 0
    %318 = vmatprep.subr.bf16.mxu0 0
    %319 = vmatpush1.bf16.xpose.msra.mxu0 0
    %320 = vmatprep.subr.bf16.mxu0 0
    %321 = vmatpush1.bf16.xpose.msra.mxu0 0
    %322 = vmatprep.subr.bf16.mxu0 0
    %323 = vmatpush1.bf16.xpose.msra.mxu0 0
    %324 = vmatprep.subr.bf16.mxu0 0
    %325 = vmatpush1.bf16.xpose.msra.mxu0 0
    %326 = vmatprep.subr.bf16.mxu0 0
    %327 = vmatpush1.bf16.xpose.msra.mxu0 0
    %328 = vmatprep.subr.bf16.mxu0 0
    %329 = vmatpush1.bf16.xpose.msra.mxu0 0
    %330 = vmatprep.subr.bf16.mxu0 0
    %331 = vmatpush1.bf16.xpose.msra.mxu0 0
    %332 = vmatprep.subr.bf16.mxu0 0
    %333 = vmatpush1.bf16.xpose.msra.mxu0 0
    %334 = vmatprep.subr.bf16.mxu0 0
    %335 = vmatpush1.bf16.xpose.msra.mxu0 0
    %336 = vmatprep.subr.bf16.mxu0 0
    %337 = vmatpush1.bf16.xpose.msra.mxu0 0
    %338 = vmatprep.subr.bf16.mxu0 0
    %339 = vmatpush1.bf16.xpose.msra.mxu0 0
    %340 = vmatprep.subr.bf16.mxu0 0
    %341 = vmatpush1.bf16.xpose.msra.mxu0 0
    %342 = vmatprep.mubr.bf16.mxu0 0
    %343 = vmatmul.mubr.bf16.gmra.mrb[0].mxu0 %v305
    %v344 = vpop.f32.mrb[0].mxu0
    %v345 = vadd.f32 0.0, %v344
    %v346 = vpop.f32.mrb[0].mxu0
    %v347 = vpop.f32.mrb[0].mxu0
    %v348 = vpop.f32.mrb[0].mxu0
    %349 = vdwg.mxu0
    %v351 = vsel %vm303, %v298, 0
    %v354 = vsel %vm303, %v300, 0
    %356 = vmatprep.subr.bf16.mxu0 0
    %357 = vmatpush1.bf16.xpose.msra.mxu0 %v354
    %358 = vmatprep.subr.bf16.mxu0 0
    %359 = vmatpush1.bf16.xpose.msra.mxu0 0
    %360 = vmatprep.subr.bf16.mxu0 0
    %361 = vmatpush1.bf16.xpose.msra.mxu0 0
    %362 = vmatprep.subr.bf16.mxu0 0
    %363 = vmatpush1.bf16.xpose.msra.mxu0 0
    %364 = vmatprep.subr.bf16.mxu0 0
    %365 = vmatpush1.bf16.xpose.msra.mxu0 0
    %366 = vmatprep.subr.bf16.mxu0 0
    %367 = vmatpush1.bf16.xpose.msra.mxu0 0
    %368 = vmatprep.subr.bf16.mxu0 0
    %369 = vmatpush1.bf16.xpose.msra.mxu0 0
    %370 = vmatprep.subr.bf16.mxu0 0
    %371 = vmatpush1.bf16.xpose.msra.mxu0 0
    %372 = vmatprep.subr.bf16.mxu0 0
    %373 = vmatpush1.bf16.xpose.msra.mxu0 0
    %374 = vmatprep.subr.bf16.mxu0 0
    %375 = vmatpush1.bf16.xpose.msra.mxu0 0
    %376 = vmatprep.subr.bf16.mxu0 0
    %377 = vmatpush1.bf16.xpose.msra.mxu0 0
    %378 = vmatprep.subr.bf16.mxu0 0
    %379 = vmatpush1.bf16.xpose.msra.mxu0 0
    %380 = vmatprep.subr.bf16.mxu0 0
    %381 = vmatpush1.bf16.xpose.msra.mxu0 0
    %382 = vmatprep.subr.bf16.mxu0 0
    %383 = vmatpush1.bf16.xpose.msra.mxu0 0
    %384 = vmatprep.subr.bf16.mxu0 0
    %385 = vmatpush1.bf16.xpose.msra.mxu0 0
    %386 = vmatprep.subr.bf16.mxu0 0
    %387 = vmatpush1.bf16.xpose.msra.mxu0 0
    %388 = vmatprep.mubr.bf16.mxu0 0
    %389 = vmatmul.mubr.bf16.gmra.mrb[0].mxu0 %v351
    %v390 = vpop.f32.mrb[0].mxu0
    %v391 = vadd.f32 0.0, %v390
    %v392 = vpop.f32.mrb[0].mxu0
    %v393 = vpop.f32.mrb[0].mxu0
    %v394 = vpop.f32.mrb[0].mxu0
    %395 = vdwg.mxu0
    %v396 = vsel %vm303, %v345, -inf
    %397 = vmax.xlane.f32.xlu0 %v396
    %v398 = vpop.xlane.xlu0 %397
    %v399 = vsel %vm303, %v391, -inf
    %400 = vmax.xlane.f32.xlu0 %v399
    %v401 = vpop.xlane.xlu0 %400
    %v402 = vsub.f32 %v345, %v398
    %v403 = vsub.f32 %v391, %v401
    %v404 = vmul.f32 %v402, 1.442695
    %v405 = vpow.pop %v404
    %v406 = vmul.f32 %v403, 1.442695
    %v407 = vpow.pop %v406
    %v408 = vsel %vm303, %v405, 0.0
    %409 = vadd.xlane.f32.xlu0 %v408
    %v410 = vpop.xlane.xlu0 %409
    %v411 = vsel %vm303, %v407, 0.0
    %412 = vadd.xlane.f32.xlu0 %v411
    %v413 = vpop.xlane.xlu0 %412
    %v414 = vrcp.pop %v410
    %v415 = vrcp.pop %v413
    %v416 = vmul.f32 %v405, %v414
    %v417 = vmul.f32 %v407, %v415
    %v418 = vpack.c.bf16 %v416, %v416
    %v419 = vpack.c.bf16 %v417, %v417
    %v421 = vsel %vm303, %v418, 0
    %vm423 = vcmask 1043456
    %v425 = vsel %vm423, %v301, 0
    %427 = vmatprep.subr.bf16.mxu0 0
    %428 = vmatpush1.bf16.msra.mxu0 %v425
    %429 = vmatprep.subr.bf16.mxu0 0
    %430 = vmatpush1.bf16.msra.mxu0 0
    %431 = vmatprep.subr.bf16.mxu0 0
    %432 = vmatpush1.bf16.msra.mxu0 0
    %433 = vmatprep.subr.bf16.mxu0 0
    %434 = vmatpush1.bf16.msra.mxu0 0
    %435 = vmatprep.subr.bf16.mxu0 0
    %436 = vmatpush1.bf16.msra.mxu0 0
    %437 = vmatprep.subr.bf16.mxu0 0
    %438 = vmatpush1.bf16.msra.mxu0 0
    %439 = vmatprep.subr.bf16.mxu0 0
    %440 = vmatpush1.bf16.msra.mxu0 0
    %441 = vmatprep.subr.bf16.mxu0 0
    %442 = vmatpush1.bf16.msra.mxu0 0
    %443 = vmatprep.subr.bf16.mxu0 0
    %444 = vmatpush1.bf16.msra.mxu0 0
    %445 = vmatprep.subr.bf16.mxu0 0
    %446 = vmatpush1.bf16.msra.mxu0 0
    %447 = vmatprep.subr.bf16.mxu0 0
    %448 = vmatpush1.bf16.msra.mxu0 0
    %449 = vmatprep.subr.bf16.mxu0 0
    %450 = vmatpush1.bf16.msra.mxu0 0
    %451 = vmatprep.subr.bf16.mxu0 0
    %452 = vmatpush1.bf16.msra.mxu0 0
    %453 = vmatprep.subr.bf16.mxu0 0
    %454 = vmatpush1.bf16.msra.mxu0 0
    %455 = vmatprep.subr.bf16.mxu0 0
    %456 = vmatpush1.bf16.msra.mxu0 0
    %457 = vmatprep.subr.bf16.mxu0 0
    %458 = vmatpush1.bf16.msra.mxu0 0
    %459 = vmatprep.mubr.bf16.mxu0 0
    %460 = vmatmul.mubr.bf16.gmra.mrb[0].mxu0 %v421
    %v461 = vpop.f32.mrb[0].mxu0
    %v462 = vadd.f32 0.0, %v461
    %v463 = vpop.f32.mrb[0].mxu0
    %v464 = vpop.f32.mrb[0].mxu0
    %v465 = vpop.f32.mrb[0].mxu0
    %466 = vdwg.mxu0
    %v468 = vsel %vm303, %v419, 0
    %v471 = vsel %vm423, %v302, 0
    %473 = vmatprep.subr.bf16.mxu0 0
    %474 = vmatpush1.bf16.msra.mxu0 %v471
    %475 = vmatprep.subr.bf16.mxu0 0
    %476 = vmatpush1.bf16.msra.mxu0 0
    %477 = vmatprep.subr.bf16.mxu0 0
    %478 = vmatpush1.bf16.msra.mxu0 0
    %479 = vmatprep.subr.bf16.mxu0 0
    %480 = vmatpush1.bf16.msra.mxu0 0
    %481 = vmatprep.subr.bf16.mxu0 0
    %482 = vmatpush1.bf16.msra.mxu0 0
    %483 = vmatprep.subr.bf16.mxu0 0
    %484 = vmatpush1.bf16.msra.mxu0 0
    %485 = vmatprep.subr.bf16.mxu0 0
    %486 = vmatpush1.bf16.msra.mxu0 0
    %487 = vmatprep.subr.bf16.mxu0 0
    %488 = vmatpush1.bf16.msra.mxu0 0
    %489 = vmatprep.subr.bf16.mxu0 0
    %490 = vmatpush1.bf16.msra.mxu0 0
    %491 = vmatprep.subr.bf16.mxu0 0
    %492 = vmatpush1.bf16.msra.mxu0 0
    %493 = vmatprep.subr.bf16.mxu0 0
    %494 = vmatpush1.bf16.msra.mxu0 0
    %495 = vmatprep.subr.bf16.mxu0 0
    %496 = vmatpush1.bf16.msra.mxu0 0
    %497 = vmatprep.subr.bf16.mxu0 0
    %498 = vmatpush1.bf16.msra.mxu0 0
    %499 = vmatprep.subr.bf16.mxu0 0
    %500 = vmatpush1.bf16.msra.mxu0 0
    %501 = vmatprep.subr.bf16.mxu0 0
    %502 = vmatpush1.bf16.msra.mxu0 0
    %503 = vmatprep.subr.bf16.mxu0 0
    %504 = vmatpush1.bf16.msra.mxu0 0
    %505 = vmatprep.mubr.bf16.mxu0 0
    %506 = vmatmul.mubr.bf16.gmra.mrb[0].mxu0 %v468
    %v507 = vpop.f32.mrb[0].mxu0
    %v508 = vadd.f32 0.0, %v507
    %v509 = vpop.f32.mrb[0].mxu0
    %v510 = vpop.f32.mrb[0].mxu0
    %v511 = vpop.f32.mrb[0].mxu0
    %512 = vdwg.mxu0
    %514 = vrot.lane.b32.xlu0 %v297, 120
    %v515 = vpop.permute.xlu0 %514
    %517 = vrot.lane.b32.xlu0 %v299, 120
    %v518 = vpop.permute.xlu0 %517
    %v520 = vsel %vm303, %v515, 0
    %v523 = vsel %vm303, %v518, 0
    %525 = vmatprep.subr.bf16.mxu0 0
    %526 = vmatpush1.bf16.xpose.msra.mxu0 %v523
    %527 = vmatprep.subr.bf16.mxu0 0
    %528 = vmatpush1.bf16.xpose.msra.mxu0 0
    %529 = vmatprep.subr.bf16.mxu0 0
    %530 = vmatpush1.bf16.xpose.msra.mxu0 0
    %531 = vmatprep.subr.bf16.mxu0 0
    %532 = vmatpush1.bf16.xpose.msra.mxu0 0
    %533 = vmatprep.subr.bf16.mxu0 0
    %534 = vmatpush1.bf16.xpose.msra.mxu0 0
    %535 = vmatprep.subr.bf16.mxu0 0
    %536 = vmatpush1.bf16.xpose.msra.mxu0 0
    %537 = vmatprep.subr.bf16.mxu0 0
    %538 = vmatpush1.bf16.xpose.msra.mxu0 0
    %539 = vmatprep.subr.bf16.mxu0 0
    %540 = vmatpush1.bf16.xpose.msra.mxu0 0
    %541 = vmatprep.subr.bf16.mxu0 0
    %542 = vmatpush1.bf16.xpose.msra.mxu0 0
    %543 = vmatprep.subr.bf16.mxu0 0
    %544 = vmatpush1.bf16.xpose.msra.mxu0 0
    %545 = vmatprep.subr.bf16.mxu0 0
    %546 = vmatpush1.bf16.xpose.msra.mxu0 0
    %547 = vmatprep.subr.bf16.mxu0 0
    %548 = vmatpush1.bf16.xpose.msra.mxu0 0
    %549 = vmatprep.subr.bf16.mxu0 0
    %550 = vmatpush1.bf16.xpose.msra.mxu0 0
    %551 = vmatprep.subr.bf16.mxu0 0
    %552 = vmatpush1.bf16.xpose.msra.mxu0 0
    %553 = vmatprep.subr.bf16.mxu0 0
    %554 = vmatpush1.bf16.xpose.msra.mxu0 0
    %555 = vmatprep.subr.bf16.mxu0 0
    %556 = vmatpush1.bf16.xpose.msra.mxu0 0
    %557 = vmatprep.mubr.bf16.mxu0 0
    %558 = vmatmul.mubr.bf16.gmra.mrb[0].mxu0 %v520
    %v559 = vpop.f32.mrb[0].mxu0
    %v560 = vadd.f32 0.0, %v559
    %v561 = vpop.f32.mrb[0].mxu0
    %v562 = vpop.f32.mrb[0].mxu0
    %v563 = vpop.f32.mrb[0].mxu0
    %564 = vdwg.mxu0
    %566 = vrot.lane.b32.xlu0 %v298, 120
    %v567 = vpop.permute.xlu0 %566
    %569 = vrot.lane.b32.xlu0 %v300, 120
    %v570 = vpop.permute.xlu0 %569
    %v572 = vsel %vm303, %v567, 0
    %v575 = vsel %vm303, %v570, 0
    %577 = vmatprep.subr.bf16.mxu0 0
    %578 = vmatpush1.bf16.xpose.msra.mxu0 %v575
    %579 = vmatprep.subr.bf16.mxu0 0
    %580 = vmatpush1.bf16.xpose.msra.mxu0 0
    %581 = vmatprep.subr.bf16.mxu0 0
    %582 = vmatpush1.bf16.xpose.msra.mxu0 0
    %583 = vmatprep.subr.bf16.mxu0 0
    %584 = vmatpush1.bf16.xpose.msra.mxu0 0
    %585 = vmatprep.subr.bf16.mxu0 0
    %586 = vmatpush1.bf16.xpose.msra.mxu0 0
    %587 = vmatprep.subr.bf16.mxu0 0
    %588 = vmatpush1.bf16.xpose.msra.mxu0 0
    %589 = vmatprep.subr.bf16.mxu0 0
    %590 = vmatpush1.bf16.xpose.msra.mxu0 0
    %591 = vmatprep.subr.bf16.mxu0 0
    %592 = vmatpush1.bf16.xpose.msra.mxu0 0
    %593 = vmatprep.subr.bf16.mxu0 0
    %594 = vmatpush1.bf16.xpose.msra.mxu0 0
    %595 = vmatprep.subr.bf16.mxu0 0
    %596 = vmatpush1.bf16.xpose.msra.mxu0 0
    %597 = vmatprep.subr.bf16.mxu0 0
    %598 = vmatpush1.bf16.xpose.msra.mxu0 0
    %599 = vmatprep.subr.bf16.mxu0 0
    %600 = vmatpush1.bf16.xpose.msra.mxu0 0
    %601 = vmatprep.subr.bf16.mxu0 0
    %602 = vmatpush1.bf16.xpose.msra.mxu0 0
    %603 = vmatprep.subr.bf16.mxu0 0
    %604 = vmatpush1.bf16.xpose.msra.mxu0 0
    %605 = vmatprep.subr.bf16.mxu0 0
    %606 = vmatpush1.bf16.xpose.msra.mxu0 0
    %607 = vmatprep.subr.bf16.mxu0 0
    %608 = vmatpush1.bf16.xpose.msra.mxu0 0
    %609 = vmatprep.mubr.bf16.mxu0 0
    %610 = vmatmul.mubr.bf16.gmra.mrb[0].mxu0 %v572
    %v611 = vpop.f32.mrb[0].mxu0
    %v612 = vadd.f32 0.0, %v611
    %v613 = vpop.f32.mrb[0].mxu0
    %v614 = vpop.f32.mrb[0].mxu0
    %v615 = vpop.f32.mrb[0].mxu0
    %616 = vdwg.mxu0
    %v617 = vsel %vm303, %v560, -inf
    %618 = vmax.xlane.f32.xlu0 %v617
    %v619 = vpop.xlane.xlu0 %618
    %v620 = vsel %vm303, %v612, -inf
    %621 = vmax.xlane.f32.xlu0 %v620
    %v622 = vpop.xlane.xlu0 %621
    %v623 = vsub.f32 %v560, %v619
    %v624 = vsub.f32 %v612, %v622
    %v625 = vmul.f32 %v623, 1.442695
    %v626 = vpow.pop %v625
    %v627 = vmul.f32 %v624, 1.442695
    %v628 = vpow.pop %v627
    %v629 = vsel %vm303, %v626, 0.0
    %630 = vadd.xlane.f32.xlu0 %v629
    %v631 = vpop.xlane.xlu0 %630
    %v632 = vsel %vm303, %v628, 0.0
    %633 = vadd.xlane.f32.xlu0 %v632
    %v634 = vpop.xlane.xlu0 %633
    %v635 = vrcp.pop %v631
    %v636 = vrcp.pop %v634
    %v637 = vmul.f32 %v626, %v635
    %v638 = vmul.f32 %v628, %v636
    %v639 = vpack.c.bf16 %v637, %v637
    %v640 = vpack.c.bf16 %v638, %v638
    %642 = vrot.lane.b32.xlu0 %v301, 120
    %v643 = vpop.permute.xlu0 %642
    %v645 = vsel %vm303, %v639, 0
    %v648 = vsel %vm423, %v643, 0
    %650 = vmatprep.subr.bf16.mxu0 0
    %651 = vmatpush1.bf16.msra.mxu0 %v648
    %652 = vmatprep.subr.bf16.mxu0 0
    %653 = vmatpush1.bf16.msra.mxu0 0
    %654 = vmatprep.subr.bf16.mxu0 0
    %655 = vmatpush1.bf16.msra.mxu0 0
    %656 = vmatprep.subr.bf16.mxu0 0
    %657 = vmatpush1.bf16.msra.mxu0 0
    %658 = vmatprep.subr.bf16.mxu0 0
    %659 = vmatpush1.bf16.msra.mxu0 0
    %660 = vmatprep.subr.bf16.mxu0 0
    %661 = vmatpush1.bf16.msra.mxu0 0
    %662 = vmatprep.subr.bf16.mxu0 0
    %663 = vmatpush1.bf16.msra.mxu0 0
    %664 = vmatprep.subr.bf16.mxu0 0
    %665 = vmatpush1.bf16.msra.mxu0 0
    %666 = vmatprep.subr.bf16.mxu0 0
    %667 = vmatpush1.bf16.msra.mxu0 0
    %668 = vmatprep.subr.bf16.mxu0 0
    %669 = vmatpush1.bf16.msra.mxu0 0
    %670 = vmatprep.subr.bf16.mxu0 0
    %671 = vmatpush1.bf16.msra.mxu0 0
    %672 = vmatprep.subr.bf16.mxu0 0
    %673 = vmatpush1.bf16.msra.mxu0 0
    %674 = vmatprep.subr.bf16.mxu0 0
    %675 = vmatpush1.bf16.msra.mxu0 0
    %676 = vmatprep.subr.bf16.mxu0 0
    %677 = vmatpush1.bf16.msra.mxu0 0
    %678 = vmatprep.subr.bf16.mxu0 0
    %679 = vmatpush1.bf16.msra.mxu0 0
    %680 = vmatprep.subr.bf16.mxu0 0
    %681 = vmatpush1.bf16.msra.mxu0 0
    %682 = vmatprep.mubr.bf16.mxu0 0
    %683 = vmatmul.mubr.bf16.gmra.mrb[0].mxu0 %v645
    %v684 = vpop.f32.mrb[0].mxu0
    %v685 = vadd.f32 0.0, %v684
    %v686 = vpop.f32.mrb[0].mxu0
    %v687 = vpop.f32.mrb[0].mxu0
    %v688 = vpop.f32.mrb[0].mxu0
    %689 = vdwg.mxu0
    %691 = vrot.lane.b32.xlu0 %v302, 120
    %v692 = vpop.permute.xlu0 %691
    %v694 = vsel %vm303, %v640, 0
    %v697 = vsel %vm423, %v692, 0
    %699 = vmatprep.subr.bf16.mxu0 0
    %700 = vmatpush1.bf16.msra.mxu0 %v697
    %701 = vmatprep.subr.bf16.mxu0 0
    %702 = vmatpush1.bf16.msra.mxu0 0
    %703 = vmatprep.subr.bf16.mxu0 0
    %704 = vmatpush1.bf16.msra.mxu0 0
    %705 = vmatprep.subr.bf16.mxu0 0
    %706 = vmatpush1.bf16.msra.mxu0 0
    %707 = vmatprep.subr.bf16.mxu0 0
    %708 = vmatpush1.bf16.msra.mxu0 0
    %709 = vmatprep.subr.bf16.mxu0 0
    %710 = vmatpush1.bf16.msra.mxu0 0
    %711 = vmatprep.subr.bf16.mxu0 0
    %712 = vmatpush1.bf16.msra.mxu0 0
    %713 = vmatprep.subr.bf16.mxu0 0
    %714 = vmatpush1.bf16.msra.mxu0 0
    %715 = vmatprep.subr.bf16.mxu0 0
    %716 = vmatpush1.bf16.msra.mxu0 0
    %717 = vmatprep.subr.bf16.mxu0 0
    %718 = vmatpush1.bf16.msra.mxu0 0
    %719 = vmatprep.subr.bf16.mxu0 0
    %720 = vmatpush1.bf16.msra.mxu0 0
    %721 = vmatprep.subr.bf16.mxu0 0
    %722 = vmatpush1.bf16.msra.mxu0 0
    %723 = vmatprep.subr.bf16.mxu0 0
    %724 = vmatpush1.bf16.msra.mxu0 0
    %725 = vmatprep.subr.bf16.mxu0 0
    %726 = vmatpush1.bf16.msra.mxu0 0
    %727 = vmatprep.subr.bf16.mxu0 0
    %728 = vmatpush1.bf16.msra.mxu0 0
    %729 = vmatprep.subr.bf16.mxu0 0
    %730 = vmatpush1.bf16.msra.mxu0 0
    %731 = vmatprep.mubr.bf16.mxu0 0
    %732 = vmatmul.mubr.bf16.gmra.mrb[0].mxu0 %v694
    %v733 = vpop.f32.mrb[0].mxu0
    %v734 = vadd.f32 0.0, %v733
    %v735 = vpop.f32.mrb[0].mxu0
    %v736 = vpop.f32.mrb[0].mxu0
    %v737 = vpop.f32.mrb[0].mxu0
    %738 = vdwg.mxu0
    %739 = vrot.lane.b32.xlu0 %v297, 112
    %v740 = vpop.permute.xlu0 %739
    %741 = vrot.lane.b32.xlu0 %v299, 112
    %v742 = vpop.permute.xlu0 %741
    %v744 = vsel %vm303, %v740, 0
    %v747 = vsel %vm303, %v742, 0
    %749 = vmatprep.subr.bf16.mxu0 0
    %750 = vmatpush1.bf16.xpose.msra.mxu0 %v747
    %751 = vmatprep.subr.bf16.mxu0 0
    %752 = vmatpush1.bf16.xpose.msra.mxu0 0
    %753 = vmatprep.subr.bf16.mxu0 0
    %754 = vmatpush1.bf16.xpose.msra.mxu0 0
    %755 = vmatprep.subr.bf16.mxu0 0
    %756 = vmatpush1.bf16.xpose.msra.mxu0 0
    %757 = vmatprep.subr.bf16.mxu0 0
    %758 = vmatpush1.bf16.xpose.msra.mxu0 0
    %759 = vmatprep.subr.bf16.mxu0 0
    %760 = vmatpush1.bf16.xpose.msra.mxu0 0
    %761 = vmatprep.subr.bf16.mxu0 0
    %762 = vmatpush1.bf16.xpose.msra.mxu0 0
    %763 = vmatprep.subr.bf16.mxu0 0
    %764 = vmatpush1.bf16.xpose.msra.mxu0 0
    %765 = vmatprep.subr.bf16.mxu0 0
    %766 = vmatpush1.bf16.xpose.msra.mxu0 0
    %767 = vmatprep.subr.bf16.mxu0 0
    %768 = vmatpush1.bf16.xpose.msra.mxu0 0
    %769 = vmatprep.subr.bf16.mxu0 0
    %770 = vmatpush1.bf16.xpose.msra.mxu0 0
    %771 = vmatprep.subr.bf16.mxu0 0
    %772 = vmatpush1.bf16.xpose.msra.mxu0 0
    %773 = vmatprep.subr.bf16.mxu0 0
    %774 = vmatpush1.bf16.xpose.msra.mxu0 0
    %775 = vmatprep.subr.bf16.mxu0 0
    %776 = vmatpush1.bf16.xpose.msra.mxu0 0
    %777 = vmatprep.subr.bf16.mxu0 0
    %778 = vmatpush1.bf16.xpose.msra.mxu0 0
    %779 = vmatprep.subr.bf16.mxu0 0
    %780 = vmatpush1.bf16.xpose.msra.mxu0 0
    %781 = vmatprep.mubr.bf16.mxu0 0
    %782 = vmatmul.mubr.bf16.gmra.mrb[0].mxu0 %v744
    %v783 = vpop.f32.mrb[0].mxu0
    %v784 = vadd.f32 0.0, %v783
    %v785 = vpop.f32.mrb[0].mxu0
    %v786 = vpop.f32.mrb[0].mxu0
    %v787 = vpop.f32.mrb[0].mxu0
    %788 = vdwg.mxu0
    %789 = vrot.lane.b32.xlu0 %v298, 112
    %v790 = vpop.permute.xlu0 %789
    %791 = vrot.lane.b32.xlu0 %v300, 112
    %v792 = vpop.permute.xlu0 %791
    %v794 = vsel %vm303, %v790, 0
    %v797 = vsel %vm303, %v792, 0
    %799 = vmatprep.subr.bf16.mxu0 0
    %800 = vmatpush1.bf16.xpose.msra.mxu0 %v797
    %801 = vmatprep.subr.bf16.mxu0 0
    %802 = vmatpush1.bf16.xpose.msra.mxu0 0
    %803 = vmatprep.subr.bf16.mxu0 0
    %804 = vmatpush1.bf16.xpose.msra.mxu0 0
    %805 = vmatprep.subr.bf16.mxu0 0
    %806 = vmatpush1.bf16.xpose.msra.mxu0 0
    %807 = vmatprep.subr.bf16.mxu0 0
    %808 = vmatpush1.bf16.xpose.msra.mxu0 0
    %809 = vmatprep.subr.bf16.mxu0 0
    %810 = vmatpush1.bf16.xpose.msra.mxu0 0
    %811 = vmatprep.subr.bf16.mxu0 0
    %812 = vmatpush1.bf16.xpose.msra.mxu0 0
    %813 = vmatprep.subr.bf16.mxu0 0
    %814 = vmatpush1.bf16.xpose.msra.mxu0 0
    %815 = vmatprep.subr.bf16.mxu0 0
    %816 = vmatpush1.bf16.xpose.msra.mxu0 0
    %817 = vmatprep.subr.bf16.mxu0 0
    %818 = vmatpush1.bf16.xpose.msra.mxu0 0
    %819 = vmatprep.subr.bf16.mxu0 0
    %820 = vmatpush1.bf16.xpose.msra.mxu0 0
    %821 = vmatprep.subr.bf16.mxu0 0
    %822 = vmatpush1.bf16.xpose.msra.mxu0 0
    %823 = vmatprep.subr.bf16.mxu0 0
    %824 = vmatpush1.bf16.xpose.msra.mxu0 0
    %825 = vmatprep.subr.bf16.mxu0 0
    %826 = vmatpush1.bf16.xpose.msra.mxu0 0
    %827 = vmatprep.subr.bf16.mxu0 0
    %828 = vmatpush1.bf16.xpose.msra.mxu0 0
    %829 = vmatprep.subr.bf16.mxu0 0
    %830 = vmatpush1.bf16.xpose.msra.mxu0 0
    %831 = vmatprep.mubr.bf16.mxu0 0
    %832 = vmatmul.mubr.bf16.gmra.mrb[0].mxu0 %v794
    %v833 = vpop.f32.mrb[0].mxu0
    %v834 = vadd.f32 0.0, %v833
    %v835 = vpop.f32.mrb[0].mxu0
    %v836 = vpop.f32.mrb[0].mxu0
    %v837 = vpop.f32.mrb[0].mxu0
    %838 = vdwg.mxu0
    %v839 = vsel %vm303, %v784, -inf
    %840 = vmax.xlane.f32.xlu0 %v839
    %v841 = vpop.xlane.xlu0 %840
    %v842 = vsel %vm303, %v834, -inf
    %843 = vmax.xlane.f32.xlu0 %v842
    %v844 = vpop.xlane.xlu0 %843
    %v845 = vsub.f32 %v784, %v841
    %v846 = vsub.f32 %v834, %v844
    %v847 = vmul.f32 %v845, 1.442695
    %v848 = vpow.pop %v847
    %v849 = vmul.f32 %v846, 1.442695
    %v850 = vpow.pop %v849
    %v851 = vsel %vm303, %v848, 0.0
    %852 = vadd.xlane.f32.xlu0 %v851
    %v853 = vpop.xlane.xlu0 %852
    %v854 = vsel %vm303, %v850, 0.0
    %855 = vadd.xlane.f32.xlu0 %v854
    %v856 = vpop.xlane.xlu0 %855
    %v857 = vrcp.pop %v853
    %v858 = vrcp.pop %v856
    %v859 = vmul.f32 %v848, %v857
    %v860 = vmul.f32 %v850, %v858
    %v861 = vpack.c.bf16 %v859, %v859
    %v862 = vpack.c.bf16 %v860, %v860
    %863 = vrot.lane.b32.xlu0 %v301, 112
    %v864 = vpop.permute.xlu0 %863
    %v866 = vsel %vm303, %v861, 0
    %v869 = vsel %vm423, %v864, 0
    %871 = vmatprep.subr.bf16.mxu0 0
    %872 = vmatpush1.bf16.msra.mxu0 %v869
    %873 = vmatprep.subr.bf16.mxu0 0
    %874 = vmatpush1.bf16.msra.mxu0 0
    %875 = vmatprep.subr.bf16.mxu0 0
    %876 = vmatpush1.bf16.msra.mxu0 0
    %877 = vmatprep.subr.bf16.mxu0 0
    %878 = vmatpush1.bf16.msra.mxu0 0
    %879 = vmatprep.subr.bf16.mxu0 0
    %880 = vmatpush1.bf16.msra.mxu0 0
    %881 = vmatprep.subr.bf16.mxu0 0
    %882 = vmatpush1.bf16.msra.mxu0 0
    %883 = vmatprep.subr.bf16.mxu0 0
    %884 = vmatpush1.bf16.msra.mxu0 0
    %885 = vmatprep.subr.bf16.mxu0 0
    %886 = vmatpush1.bf16.msra.mxu0 0
    %887 = vmatprep.subr.bf16.mxu0 0
    %888 = vmatpush1.bf16.msra.mxu0 0
    %889 = vmatprep.subr.bf16.mxu0 0
    %890 = vmatpush1.bf16.msra.mxu0 0
    %891 = vmatprep.subr.bf16.mxu0 0
    %892 = vmatpush1.bf16.msra.mxu0 0
    %893 = vmatprep.subr.bf16.mxu0 0
    %894 = vmatpush1.bf16.msra.mxu0 0
    %895 = vmatprep.subr.bf16.mxu0 0
    %896 = vmatpush1.bf16.msra.mxu0 0
    %897 = vmatprep.subr.bf16.mxu0 0
    %898 = vmatpush1.bf16.msra.mxu0 0
    %899 = vmatprep.subr.bf16.mxu0 0
    %900 = vmatpush1.bf16.msra.mxu0 0
    %901 = vmatprep.subr.bf16.mxu0 0
    %902 = vmatpush1.bf16.msra.mxu0 0
    %903 = vmatprep.mubr.bf16.mxu0 0
    %904 = vmatmul.mubr.bf16.gmra.mrb[0].mxu0 %v866
    %v905 = vpop.f32.mrb[0].mxu0
    %v906 = vadd.f32 0.0, %v905
    %v907 = vpop.f32.mrb[0].mxu0
    %v908 = vpop.f32.mrb[0].mxu0
    %v909 = vpop.f32.mrb[0].mxu0
    %910 = vdwg.mxu0
    %911 = vrot.lane.b32.xlu0 %v302, 112
    %v912 = vpop.permute.xlu0 %911
    %v914 = vsel %vm303, %v862, 0
    %v917 = vsel %vm423, %v912, 0
    %919 = vmatprep.subr.bf16.mxu0 0
    %920 = vmatpush1.bf16.msra.mxu0 %v917
    %921 = vmatprep.subr.bf16.mxu0 0
    %922 = vmatpush1.bf16.msra.mxu0 0
    %923 = vmatprep.subr.bf16.mxu0 0
    %924 = vmatpush1.bf16.msra.mxu0 0
    %925 = vmatprep.subr.bf16.mxu0 0
    %926 = vmatpush1.bf16.msra.mxu0 0
    %927 = vmatprep.subr.bf16.mxu0 0
    %928 = vmatpush1.bf16.msra.mxu0 0
    %929 = vmatprep.subr.bf16.mxu0 0
    %930 = vmatpush1.bf16.msra.mxu0 0
    %931 = vmatprep.subr.bf16.mxu0 0
    %932 = vmatpush1.bf16.msra.mxu0 0
    %933 = vmatprep.subr.bf16.mxu0 0
    %934 = vmatpush1.bf16.msra.mxu0 0
    %935 = vmatprep.subr.bf16.mxu0 0
    %936 = vmatpush1.bf16.msra.mxu0 0
    %937 = vmatprep.subr.bf16.mxu0 0
    %938 = vmatpush1.bf16.msra.mxu0 0
    %939 = vmatprep.subr.bf16.mxu0 0
    %940 = vmatpush1.bf16.msra.mxu0 0
    %941 = vmatprep.subr.bf16.mxu0 0
    %942 = vmatpush1.bf16.msra.mxu0 0
    %943 = vmatprep.subr.bf16.mxu0 0
    %944 = vmatpush1.bf16.msra.mxu0 0
    %945 = vmatprep.subr.bf16.mxu0 0
    %946 = vmatpush1.bf16.msra.mxu0 0
    %947 = vmatprep.subr.bf16.mxu0 0
    %948 = vmatpush1.bf16.msra.mxu0 0
    %949 = vmatprep.subr.bf16.mxu0 0
    %950 = vmatpush1.bf16.msra.mxu0 0
    %951 = vmatprep.mubr.bf16.mxu0 0
    %952 = vmatmul.mubr.bf16.gmra.mrb[0].mxu0 %v914
    %v953 = vpop.f32.mrb[0].mxu0
    %v954 = vadd.f32 0.0, %v953
    %v955 = vpop.f32.mrb[0].mxu0
    %v956 = vpop.f32.mrb[0].mxu0
    %v957 = vpop.f32.mrb[0].mxu0
    %958 = vdwg.mxu0
    %959 = vrot.lane.b32.xlu0 %v297, 104
    %v960 = vpop.permute.xlu0 %959
    %961 = vrot.lane.b32.xlu0 %v299, 104
    %v962 = vpop.permute.xlu0 %961
    %v964 = vsel %vm303, %v960, 0
    %v967 = vsel %vm303, %v962, 0
    %969 = vmatprep.subr.bf16.mxu0 0
    %970 = vmatpush1.bf16.xpose.msra.mxu0 %v967
    %971 = vmatprep.subr.bf16.mxu0 0
    %972 = vmatpush1.bf16.xpose.msra.mxu0 0
    %973 = vmatprep.subr.bf16.mxu0 0
    %974 = vmatpush1.bf16.xpose.msra.mxu0 0
    %975 = vmatprep.subr.bf16.mxu0 0
    %976 = vmatpush1.bf16.xpose.msra.mxu0 0
    %977 = vmatprep.subr.bf16.mxu0 0
    %978 = vmatpush1.bf16.xpose.msra.mxu0 0
    %979 = vmatprep.subr.bf16.mxu0 0
    %980 = vmatpush1.bf16.xpose.msra.mxu0 0
    %981 = vmatprep.subr.bf16.mxu0 0
    %982 = vmatpush1.bf16.xpose.msra.mxu0 0
    %983 = vmatprep.subr.bf16.mxu0 0
    %984 = vmatpush1.bf16.xpose.msra.mxu0 0
    %985 = vmatprep.subr.bf16.mxu0 0
    %986 = vmatpush1.bf16.xpose.msra.mxu0 0
    %987 = vmatprep.subr.bf16.mxu0 0
    %988 = vmatpush1.bf16.xpose.msra.mxu0 0
    %989 = vmatprep.subr.bf16.mxu0 0
    %990 = vmatpush1.bf16.xpose.msra.mxu0 0
    %991 = vmatprep.subr.bf16.mxu0 0
    %992 = vmatpush1.bf16.xpose.msra.mxu0 0
    %993 = vmatprep.subr.bf16.mxu0 0
    %994 = vmatpush1.bf16.xpose.msra.mxu0 0
    %995 = vmatprep.subr.bf16.mxu0 0
    %996 = vmatpush1.bf16.xpose.msra.mxu0 0
    %997 = vmatprep.subr.bf16.mxu0 0
    %998 = vmatpush1.bf16.xpose.msra.mxu0 0
    %999 = vmatprep.subr.bf16.mxu0 0
    %1000 = vmatpush1.bf16.xpose.msra.mxu0 0
    %1001 = vmatprep.mubr.bf16.mxu0 0
    %1002 = vmatmul.mubr.bf16.gmra.mrb[0].mxu0 %v964
    %v1003 = vpop.f32.mrb[0].mxu0
    %v1004 = vadd.f32 0.0, %v1003
    %v1005 = vpop.f32.mrb[0].mxu0
    %v1006 = vpop.f32.mrb[0].mxu0
    %v1007 = vpop.f32.mrb[0].mxu0
    %1008 = vdwg.mxu0
    %1009 = vrot.lane.b32.xlu0 %v298, 104
    %v1010 = vpop.permute.xlu0 %1009
    %1011 = vrot.lane.b32.xlu0 %v300, 104
    %v1012 = vpop.permute.xlu0 %1011
    %v1014 = vsel %vm303, %v1010, 0
    %v1017 = vsel %vm303, %v1012, 0
    %1019 = vmatprep.subr.bf16.mxu0 0
    %1020 = vmatpush1.bf16.xpose.msra.mxu0 %v1017
    %1021 = vmatprep.subr.bf16.mxu0 0
    %1022 = vmatpush1.bf16.xpose.msra.mxu0 0
    %1023 = vmatprep.subr.bf16.mxu0 0
    %1024 = vmatpush1.bf16.xpose.msra.mxu0 0
    %1025 = vmatprep.subr.bf16.mxu0 0
    %1026 = vmatpush1.bf16.xpose.msra.mxu0 0
    %1027 = vmatprep.subr.bf16.mxu0 0
    %1028 = vmatpush1.bf16.xpose.msra.mxu0 0
    %1029 = vmatprep.subr.bf16.mxu0 0
    %1030 = vmatpush1.bf16.xpose.msra.mxu0 0
    %1031 = vmatprep.subr.bf16.mxu0 0
    %1032 = vmatpush1.bf16.xpose.msra.mxu0 0
    %1033 = vmatprep.subr.bf16.mxu0 0
    %1034 = vmatpush1.bf16.xpose.msra.mxu0 0
    %1035 = vmatprep.subr.bf16.mxu0 0
    %1036 = vmatpush1.bf16.xpose.msra.mxu0 0
    %1037 = vmatprep.subr.bf16.mxu0 0
    %1038 = vmatpush1.bf16.xpose.msra.mxu0 0
    %1039 = vmatprep.subr.bf16.mxu0 0
    %1040 = vmatpush1.bf16.xpose.msra.mxu0 0
    %1041 = vmatprep.subr.bf16.mxu0 0
    %1042 = vmatpush1.bf16.xpose.msra.mxu0 0
    %1043 = vmatprep.subr.bf16.mxu0 0
    %1044 = vmatpush1.bf16.xpose.msra.mxu0 0
    %1045 = vmatprep.subr.bf16.mxu0 0
    %1046 = vmatpush1.bf16.xpose.msra.mxu0 0
    %1047 = vmatprep.subr.bf16.mxu0 0
    %1048 = vmatpush1.bf16.xpose.msra.mxu0 0
    %1049 = vmatprep.subr.bf16.mxu0 0
    %1050 = vmatpush1.bf16.xpose.msra.mxu0 0
    %1051 = vmatprep.mubr.bf16.mxu0 0
    %1052 = vmatmul.mubr.bf16.gmra.mrb[0].mxu0 %v1014
    %v1053 = vpop.f32.mrb[0].mxu0
    %v1054 = vadd.f32 0.0, %v1053
    %v1055 = vpop.f32.mrb[0].mxu0
    %v1056 = vpop.f32.mrb[0].mxu0
    %v1057 = vpop.f32.mrb[0].mxu0
    %1058 = vdwg.mxu0
    %v1059 = vsel %vm303, %v1004, -inf
    %1060 = vmax.xlane.f32.xlu0 %v1059
    %v1061 = vpop.xlane.xlu0 %1060
    %v1062 = vsel %vm303, %v1054, -inf
    %1063 = vmax.xlane.f32.xlu0 %v1062
    %v1064 = vpop.xlane.xlu0 %1063
    %v1065 = vsub.f32 %v1004, %v1061
    %v1066 = vsub.f32 %v1054, %v1064
    %v1067 = vmul.f32 %v1065, 1.442695
    %v1068 = vpow.pop %v1067
    %v1069 = vmul.f32 %v1066, 1.442695
    %v1070 = vpow.pop %v1069
    %v1071 = vsel %vm303, %v1068, 0.0
    %1072 = vadd.xlane.f32.xlu0 %v1071
    %v1073 = vpop.xlane.xlu0 %1072
    %v1074 = vsel %vm303, %v1070, 0.0
    %1075 = vadd.xlane.f32.xlu0 %v1074
    %v1076 = vpop.xlane.xlu0 %1075
    %v1077 = vrcp.pop %v1073
    %v1078 = vrcp.pop %v1076
    %v1079 = vmul.f32 %v1068, %v1077
    %v1080 = vmul.f32 %v1070, %v1078
    %v1081 = vpack.c.bf16 %v1079, %v1079
    %v1082 = vpack.c.bf16 %v1080, %v1080
    %1083 = vrot.lane.b32.xlu0 %v301, 104
    %v1084 = vpop.permute.xlu0 %1083
    %v1086 = vsel %vm303, %v1081, 0
    %v1089 = vsel %vm423, %v1084, 0
    %1091 = vmatprep.subr.bf16.mxu0 0
    %1092 = vmatpush1.bf16.msra.mxu0 %v1089
    %1093 = vmatprep.subr.bf16.mxu0 0
    %1094 = vmatpush1.bf16.msra.mxu0 0
    %1095 = vmatprep.subr.bf16.mxu0 0
    %1096 = vmatpush1.bf16.msra.mxu0 0
    %1097 = vmatprep.subr.bf16.mxu0 0
    %1098 = vmatpush1.bf16.msra.mxu0 0
    %1099 = vmatprep.subr.bf16.mxu0 0
    %1100 = vmatpush1.bf16.msra.mxu0 0
    %1101 = vmatprep.subr.bf16.mxu0 0
    %1102 = vmatpush1.bf16.msra.mxu0 0
    %1103 = vmatprep.subr.bf16.mxu0 0
    %1104 = vmatpush1.bf16.msra.mxu0 0
    %1105 = vmatprep.subr.bf16.mxu0 0
    %1106 = vmatpush1.bf16.msra.mxu0 0
    %1107 = vmatprep.subr.bf16.mxu0 0
    %1108 = vmatpush1.bf16.msra.mxu0 0
    %1109 = vmatprep.subr.bf16.mxu0 0
    %1110 = vmatpush1.bf16.msra.mxu0 0
    %1111 = vmatprep.subr.bf16.mxu0 0
    %1112 = vmatpush1.bf16.msra.mxu0 0
    %1113 = vmatprep.subr.bf16.mxu0 0
    %1114 = vmatpush1.bf16.msra.mxu0 0
    %1115 = vmatprep.subr.bf16.mxu0 0
    %1116 = vmatpush1.bf16.msra.mxu0 0
    %1117 = vmatprep.subr.bf16.mxu0 0
    %1118 = vmatpush1.bf16.msra.mxu0 0
    %1119 = vmatprep.subr.bf16.mxu0 0
    %1120 = vmatpush1.bf16.msra.mxu0 0
    %1121 = vmatprep.subr.bf16.mxu0 0
    %1122 = vmatpush1.bf16.msra.mxu0 0
    %1123 = vmatprep.mubr.bf16.mxu0 0
    %1124 = vmatmul.mubr.bf16.gmra.mrb[0].mxu0 %v1086
    %v1125 = vpop.f32.mrb[0].mxu0
    %v1126 = vadd.f32 0.0, %v1125
    %v1127 = vpop.f32.mrb[0].mxu0
    %v1128 = vpop.f32.mrb[0].mxu0
    %v1129 = vpop.f32.mrb[0].mxu0
    %1130 = vdwg.mxu0
    %1131 = vrot.lane.b32.xlu0 %v302, 104
    %v1132 = vpop.permute.xlu0 %1131
    %v1134 = vsel %vm303, %v1082, 0
    %v1137 = vsel %vm423, %v1132, 0
    %1139 = vmatprep.subr.bf16.mxu0 0
    %1140 = vmatpush1.bf16.msra.mxu0 %v1137
    %1141 = vmatprep.subr.bf16.mxu0 0
    %1142 = vmatpush1.bf16.msra.mxu0 0
    %1143 = vmatprep.subr.bf16.mxu0 0
    %1144 = vmatpush1.bf16.msra.mxu0 0
    %1145 = vmatprep.subr.bf16.mxu0 0
    %1146 = vmatpush1.bf16.msra.mxu0 0
    %1147 = vmatprep.subr.bf16.mxu0 0
    %1148 = vmatpush1.bf16.msra.mxu0 0
    %1149 = vmatprep.subr.bf16.mxu0 0
    %1150 = vmatpush1.bf16.msra.mxu0 0
    %1151 = vmatprep.subr.bf16.mxu0 0
    %1152 = vmatpush1.bf16.msra.mxu0 0
    %1153 = vmatprep.subr.bf16.mxu0 0
    %1154 = vmatpush1.bf16.msra.mxu0 0
    %1155 = vmatprep.subr.bf16.mxu0 0
    %1156 = vmatpush1.bf16.msra.mxu0 0
    %1157 = vmatprep.subr.bf16.mxu0 0
    %1158 = vmatpush1.bf16.msra.mxu0 0
    %1159 = vmatprep.subr.bf16.mxu0 0
    %1160 = vmatpush1.bf16.msra.mxu0 0
    %1161 = vmatprep.subr.bf16.mxu0 0
    %1162 = vmatpush1.bf16.msra.mxu0 0
    %1163 = vmatprep.subr.bf16.mxu0 0
    %1164 = vmatpush1.bf16.msra.mxu0 0
    %1165 = vmatprep.subr.bf16.mxu0 0
    %1166 = vmatpush1.bf16.msra.mxu0 0
    %1167 = vmatprep.subr.bf16.mxu0 0
    %1168 = vmatpush1.bf16.msra.mxu0 0
    %1169 = vmatprep.subr.bf16.mxu0 0
    %1170 = vmatpush1.bf16.msra.mxu0 0
    %1171 = vmatprep.mubr.bf16.mxu0 0
    %1172 = vmatmul.mubr.bf16.gmra.mrb[0].mxu0 %v1134
    %v1173 = vpop.f32.mrb[0].mxu0
    %v1174 = vadd.f32 0.0, %v1173
    %v1175 = vpop.f32.mrb[0].mxu0
    %v1176 = vpop.f32.mrb[0].mxu0
    %v1177 = vpop.f32.mrb[0].mxu0
    %1178 = vdwg.mxu0
    %1181 = vrot.lane.b32.xlu0 %v685, 8
    %v1182 = vpop.permute.xlu0 %1181
    %1183 = vrot.lane.b32.xlu0 %v734, 8
    %v1184 = vpop.permute.xlu0 %1183
    %1189 = vrot.lane.b32.xlu0 %v906, 16
    %v1190 = vpop.permute.xlu0 %1189
    %1191 = vrot.lane.b32.xlu0 %v954, 16
    %v1192 = vpop.permute.xlu0 %1191
    %1197 = vrot.lane.b32.xlu0 %v1126, 24
    %v1198 = vpop.permute.xlu0 %1197
    %1199 = vrot.lane.b32.xlu0 %v1174, 24
    %v1200 = vpop.permute.xlu0 %1199
    %v1203 = vsel %vm303, %v462, %v1182
    %v1204 = vsel %vm303, %v508, %v1184
    %vm1205 = vcmask 130048
    %v1206 = vsel %vm1205, %v1203, %v1190
    %v1207 = vsel %vm1205, %v1204, %v1192
    %vm1208 = vcmask 195584
    %v1209 = vsel %vm1208, %v1206, %v1198
    %v1210 = vsel %vm1208, %v1207, %v1200
    %v1211 = vpack.c.bf16 %v1210, %v1209
    %v1212 = vld [vmem:[#allocation10] sm:$0xf]
    %v1213 = vld [vmem:[#allocation10 + $0x4] sm:$0xf]
    %v1214 = vld [vmem:[#allocation10 + $0x8] sm:$0xf]
    %v1215 = vld [vmem:[#allocation10 + $0xc] sm:$0xf]
    %v1216 = vld [vmem:[%s5] sm:$0x1]
    %v1218 = vlaneseq
    %v1219 = vshrl.u32 %v1218, 7
    %v1220 = vsub.s32 0, %v1219
    %v1221 = vrot.slane %v1216, %v1220
    %v1227 = vunpack.c.l.b16 %v1212
    %v1228 = vunpack.c.l.b16 %v1213
    %v1229 = vunpack.c.l.b16 %v1214
    %v1230 = vunpack.c.l.b16 %v1215
    %v1231 = vpack.c.b16 %v1228, %v1227
    %v1232 = vpack.c.b16 %v1230, %v1229
    %v1236 = vsel %vm120, %v1211, 0
    %1238 = vmatprep.subr.bf16.mxu0 0
    %1239 = vmatpush1.bf16.msra.mxu0 %v1231
    %1240 = vmatprep.subr.bf16.mxu0 0
    %1241 = vmatpush1.bf16.msra.mxu0 %v1232
    %1242 = vmatprep.subr.bf16.mxu0 0
    %1243 = vmatpush1.bf16.msra.mxu0 0
    %1244 = vmatprep.subr.bf16.mxu0 0
    %1245 = vmatpush1.bf16.msra.mxu0 0
    %1246 = vmatprep.subr.bf16.mxu0 0
    %1247 = vmatpush1.bf16.msra.mxu0 0
    %1248 = vmatprep.subr.bf16.mxu0 0
    %1249 = vmatpush1.bf16.msra.mxu0 0
    %1250 = vmatprep.subr.bf16.mxu0 0
    %1251 = vmatpush1.bf16.msra.mxu0 0
    %1252 = vmatprep.subr.bf16.mxu0 0
    %1253 = vmatpush1.bf16.msra.mxu0 0
    %1254 = vmatprep.subr.bf16.mxu0 0
    %1255 = vmatpush1.bf16.msra.mxu0 0
    %1256 = vmatprep.subr.bf16.mxu0 0
    %1257 = vmatpush1.bf16.msra.mxu0 0
    %1258 = vmatprep.subr.bf16.mxu0 0
    %1259 = vmatpush1.bf16.msra.mxu0 0
    %1260 = vmatprep.subr.bf16.mxu0 0
    %1261 = vmatpush1.bf16.msra.mxu0 0
    %1262 = vmatprep.subr.bf16.mxu0 0
    %1263 = vmatpush1.bf16.msra.mxu0 0
    %1264 = vmatprep.subr.bf16.mxu0 0
    %1265 = vmatpush1.bf16.msra.mxu0 0
    %1266 = vmatprep.subr.bf16.mxu0 0
    %1267 = vmatpush1.bf16.msra.mxu0 0
    %1268 = vmatprep.subr.bf16.mxu0 0
    %1269 = vmatpush1.bf16.msra.mxu0 0
    %1270 = vmatprep.mubr.bf16.mxu0 0
    %1271 = vmatmul.mubr.bf16.gmra.mrb[0].mxu0 %v1236
    %v1272 = vpop.f32.mrb[0].mxu0
    %v1273 = vadd.f32 %v1221, %v1272
    %v1274 = vpop.f32.mrb[0].mxu0
    %v1275 = vpop.f32.mrb[0].mxu0
    %v1276 = vadd.f32 %v1221, %v1275
    %v1277 = vpop.f32.mrb[0].mxu0
    %1278 = vdwg.mxu0
    %1279 = vst.msk [vmem:[#allocation11] sm:$0xff] %vm120, %v1273
    %1280 = vst.msk [vmem:[#allocation11 + $0x8] sm:$0xff] %vm120, %v1276
    // Predicated region
    $region46: #{tpu_custom_call.1} parent=1 // pred_check
      _
    $region47: #{tpu_custom_call.1} parent=1 // pred_check_branch
      %1282 = sbr.rel (0) target = $region49
    $region48: #{tpu_custom_call.1} parent=1 // pred_region
      %s1284 = ssub.s32 256, 256
      %1285 = vsyncadd [#allocation4], %s1284
      %s1286 = sshll.u32 [#allocation11], 4
      %s1287 = int_to_ptr.vmem [resolvable:$true] %s1286
      %1292 = dma.vmem_to_hbm [thread:$0]  %s1287, 256, %s6, [#allocation4], 128, 128, 8
    $region49: #{tpu_custom_call.1} parent=1 // pred_fallthru
      _
    // Predicated region
    $region50: #{tpu_custom_call.1} parent=1 // pred_check
      _
    $region51: #{tpu_custom_call.1} parent=1 // pred_check_branch
      %1294 = sbr.rel (0) target = $region53
    $region52: #{tpu_custom_call.1} parent=1 // pred_region
      %1295 = dma.done [#allocation4], 256
    $region53: #{tpu_custom_call.1} parent=1 // pred_fallthru
      _
    %1296 = vsyncpa [#allocation3], 1
    %1297 = vsyncpa [#allocation6], 1
    %1298 = vsyncpa [#allocation9], 1
    %1299 = vsyncpa [#allocation4], 1

</llo_original>
